<compile_context>
chip_gen: v7x
topology: tpu7x:2x2x1
jax: 0.10.0
libtpu: 0.0.40
codegen_flags: <defaults>
</compile_context>

<pallas_src>
import functools

import jax
import jax.numpy as jnp
from jax.experimental import pallas as pl
from jax.experimental.pallas import tpu as pltpu

LN_EPS = 1e-12   # matches nn.LayerNorm(..., eps=1e-12) in the PyTorch module


# ---------------------------------------------------------------------------
# Fused kernel: one block of Bb batch elements per grid step
# ---------------------------------------------------------------------------
def _fused_kernel(x_ref, w1_ref, mats_ref, vecs_ref, out_ref, *, agg):
    # x_ref:    (Bb, T, L*H)   layer features packed along lanes
    # w1_ref:   (L*H, L*A)     block-diagonal FFN w_1
    # mats_ref: (5, L*A, L*A)  [W2bd, seg_sum, fold, wlin_avg_pad, wlin_std_pad]
    # vecs_ref: (16, L*A)      packed bias / gamma / beta / attention vectors
    # out_ref:  (Bb, L*A)      O output features tiled across the lanes
    Bb, T, LH = x_ref.shape
    LA = w1_ref.shape[1]
    inv_a = 1.0 / agg
    tm1 = float(T - 1)

    w1 = w1_ref[...]
    w2 = mats_ref[0]                      # block-diag FFN w_2
    seg_sum = mats_ref[1]                 # block-diag ones(A,A): per-segment sum, bcast
    fold = mats_ref[2]                    # tiled eye(A): sum over layers, bcast back
    wlin_a = mats_ref[3]                  # final Linear, avg half (rows >=A are zero)
    wlin_s = mats_ref[4]                  # final Linear, std half (rows >=A are zero)

    b1 = vecs_ref[0:1, :]
    b2 = vecs_ref[1:2, :]
    ln_g = vecs_ref[2:3, :]
    ln_b = vecs_ref[3:4, :]
    mmw = vecs_ref[4:5, :]                # per-layer ASP weights, lane-packed
    watt_a = vecs_ref[5:6, :]             # AHP_W_att avg half, tiled per segment
    watt_s = vecs_ref[6:7, :]             # AHP_W_att std half, tiled per segment
    mmw_top = vecs_ref[7:8, :]            # top ASP weights (segment 0, zero elsewhere)
    blin = vecs_ref[8:9, :]               # linear bias, lane-tiled
    ln2_g = vecs_ref[9:10, :]             # final LN gamma, lane-tiled
    ln2_b = vecs_ref[10:11, :]            # final LN beta, lane-tiled

    # ---- all L per-layer FFNs as two 128-lane matmuls (dropout == identity) ----
    xx = x_ref[...].reshape(Bb * T, LH)
    h = jnp.maximum(jnp.dot(xx, w1, preferred_element_type=jnp.float32) + b1, 0.0)
    y = jnp.dot(h, w2, preferred_element_type=jnp.float32) + b2          # (Bb*T, LA)

    # ---- per-layer LayerNorm: segment mean/var via block-diag matmul ----
    mu = jnp.dot(y, seg_sum, preferred_element_type=jnp.float32) * inv_a
    var = jnp.dot((y - mu) ** 2, seg_sum, preferred_element_type=jnp.float32) * inv_a
    yn = (y - mu) * jax.lax.rsqrt(var + LN_EPS) * ln_g + ln_b            # (Bb*T, LA)

    # ---- per-layer SelfWeightedPooling (softmax over T, avg + unbiased std) ----
    sc = jnp.dot(yn * mmw, seg_sum, preferred_element_type=jnp.float32)  # score, bcast/seg
    yn3 = yn.reshape(Bb, T, LA)
    t3 = jnp.tanh(sc).reshape(Bb, T, LA)
    e = jnp.exp(t3 - jnp.max(t3, axis=1, keepdims=True))
    attn = e / jnp.sum(e, axis=1, keepdims=True)
    wtd = yn3 * attn
    avg = jnp.sum(wtd, axis=1)                                           # (Bb, LA)
    dev = wtd - jnp.mean(wtd, axis=1, keepdims=True)
    std = jnp.sqrt(jnp.sum(dev * dev, axis=1) / tm1)                     # (Bb, LA)

    # ---- layer-attention softmax across the L lane segments (XLU lane reduce) ----
    s = jnp.dot(avg * watt_a + std * watt_s, seg_sum,
                preferred_element_type=jnp.float32)                      # (Bb, LA)
    ts = jnp.tanh(s)
    el = jnp.exp(ts - jnp.max(ts, axis=-1, keepdims=True))
    lattn = el / (jnp.sum(el, axis=-1, keepdims=True) * inv_a)           # softmax over L

    # weighted sum over layers, folded and broadcast back across segments
    ywt = (yn3 * lattn[:, None, :]).reshape(Bb * T, LA)
    wx3 = jnp.dot(ywt, fold, preferred_element_type=jnp.float32).reshape(Bb, T, LA)

    # ---- top-level SelfWeightedPooling ----
    sc_t = jnp.sum(wx3 * mmw_top, axis=-1, keepdims=True)                # (Bb, T, 1)
    tt = jnp.tanh(sc_t)
    et = jnp.exp(tt - jnp.max(tt, axis=1, keepdims=True))
    attn_t = et / jnp.sum(et, axis=1, keepdims=True)
    wtd_t = wx3 * attn_t
    avg_t = jnp.sum(wtd_t, axis=1)                                       # (Bb, LA)
    dev_t = wtd_t - jnp.mean(wtd_t, axis=1, keepdims=True)
    std_t = jnp.sqrt(jnp.sum(dev_t * dev_t, axis=1) / tm1)               # (Bb, LA)

    # ---- final Linear (avg/std halves) + LayerNorm; O features tiled over lanes ----
    o = (jnp.dot(avg_t, wlin_a, preferred_element_type=jnp.float32)
         + jnp.dot(std_t, wlin_s, preferred_element_type=jnp.float32) + blin)
    mu_o = jnp.mean(o, axis=-1, keepdims=True)       # mean over tiled copies == mean over O
    var_o = jnp.mean((o - mu_o) ** 2, axis=-1, keepdims=True)
    out_ref[...] = (o - mu_o) * jax.lax.rsqrt(var_o + LN_EPS) * ln2_g + ln2_b


# ---------------------------------------------------------------------------
# Wrapper
# ---------------------------------------------------------------------------
def b_linear_forward(x, params, block_b=8):
    B, L, T, H = x.shape
    A = params["w1"].shape[-1]
    O = params["wlin"].shape[-1]
    LH, LA = L * H, L * A
    assert LA % O == 0, "num_layer * agg_size must be a multiple of output_size"
    rep = LA // O
    f32 = jnp.float32

    # batch blocking: pad B up to a multiple of the block size (zero rows are NaN-safe)
    Bb = block_b
    pad = (-B) % Bb
    if pad:
        x = jnp.concatenate([x, jnp.zeros((pad,) + x.shape[1:], x.dtype)], axis=0)
    nb = (B + pad) // Bb

    # lane-dense input: (B_pad, T, L*H) with layer features packed along lanes
    x_r = jnp.transpose(x, (0, 2, 1, 3)).reshape(B + pad, T, LH)

    # block-diagonal fused weights / helper matrices (grid-invariant, DMA'd once)
    w1bd = jax.scipy.linalg.block_diag(*[params["w1"][l] for l in range(L)]).astype(f32)
    w2bd = jax.scipy.linalg.block_diag(*[params["w2"][l] for l in range(L)]).astype(f32)
    seg_sum = jnp.kron(jnp.eye(L, dtype=f32), jnp.ones((A, A), f32))     # segment sum+bcast
    fold = jnp.tile(jnp.eye(A, dtype=f32), (L, L))                       # layer fold+bcast
    wlin_a = jnp.zeros((LA, LA), f32).at[:A, :].set(jnp.tile(params["wlin"][:A], (1, rep)))
    wlin_s = jnp.zeros((LA, LA), f32).at[:A, :].set(jnp.tile(params["wlin"][A:], (1, rep)))
    mats = jnp.stack([w2bd, seg_sum, fold, wlin_a, wlin_s], axis=0)      # (5, LA, LA)

    # all tiny per-layer / global vectors packed into one (16, LA) slab -> one DMA
    watt = params["watt"].reshape(2 * A)
    vecs = jnp.concatenate([
        params["b1"].reshape(1, LA), params["b2"].reshape(1, LA),
        params["ln_g"].reshape(1, LA), params["ln_b"].reshape(1, LA),
        params["mmw"].reshape(1, LA),
        jnp.tile(watt[:A].reshape(1, A), (1, L)),
        jnp.tile(watt[A:].reshape(1, A), (1, L)),
        jnp.zeros((1, LA), f32).at[:, :A].set(params["mmw_top"]),
        jnp.tile(params["blin"], (1, rep)),
        jnp.tile(params["ln2_g"], (1, rep)),
        jnp.tile(params["ln2_b"], (1, rep)),
        jnp.zeros((5, LA), f32),
    ], axis=0)                                                           # (16, LA)

    kernel = functools.partial(_fused_kernel, agg=A)
    out = pl.pallas_call(
        kernel,
        out_shape=jax.ShapeDtypeStruct((B + pad, LA), jnp.float32),
        grid_spec=pltpu.PrefetchScalarGridSpec(
            num_scalar_prefetch=0,
            grid=(nb,),
            in_specs=[
                pl.BlockSpec((Bb, T, LH), lambda b: (b, 0, 0)),          # x (lane-packed)
                pl.BlockSpec((LH, LA), lambda b: (0, 0)),                # block-diag w1
                pl.BlockSpec((5, LA, LA), lambda b: (0, 0, 0)),          # packed matrices
                pl.BlockSpec((16, LA), lambda b: (0, 0)),                # packed vectors
            ],
            out_specs=pl.BlockSpec((Bb, LA), lambda b: (b, 0)),
        ),
        compiler_params=pltpu.CompilerParams(
            dimension_semantics=("parallel",),
            vmem_limit_bytes=32 * 1024 * 1024,
        ),
    )(x_r, w1bd, mats, vecs)

    return out[:B, :O]


# ---------------------------------------------------------------------------
# Pure-JAX reference (same math) for a sanity check
# ---------------------------------------------------------------------------
def b_linear_ref(x, p):
    B, L, T, H = x.shape

    def asp_pool(y, mmw):                       # y: (T, A), mmw: (1, A)
        s = y @ mmw.T                           # (T, 1)
        a = jax.nn.softmax(jnp.tanh(s), axis=0)
        w = y * a
        avg = w.sum(0)
        std = jnp.sqrt(((w - w.mean(0)) ** 2).sum(0) / (T - 1))
        return jnp.concatenate([avg, std], axis=-1)

    outs, atts = [], []
    for l in range(L):
        xi = x[:, l]                                            # (B, T, H)
        h = jnp.maximum(xi @ p["w1"][l] + p["b1"][l, 0], 0.0)
        y = h @ p["w2"][l] + p["b2"][l, 0]
        mu = y.mean(-1, keepdims=True)
        var = ((y - mu) ** 2).mean(-1, keepdims=True)
        yn = (y - mu) * jax.lax.rsqrt(var + LN_EPS) * p["ln_g"][l, 0] + p["ln_b"][l, 0]
        outs.append(yn)
        atts.append(jnp.stack([asp_pool(yn[b], p["mmw"][l]) for b in range(B)]))
    y_all = jnp.stack(outs, axis=1)                             # (B, L, T, A)
    att = jnp.stack(atts, axis=1)                               # (B, L, 2A)

    scores = jnp.einsum("bld,do->blo", att, p["watt"])          # (B, L, 1)
    lattn = jax.nn.softmax(jnp.tanh(scores), axis=1)[..., None]  # (B, L, 1, 1)
    wx = (y_all * lattn).sum(1)                                  # (B, T, A)

    rep = jnp.stack([asp_pool(wx[b], p["mmw_top"]) for b in range(B)])  # (B, 2A)
    o = rep @ p["wlin"] + p["blin"][0]
    mu = o.mean(-1, keepdims=True)
    var = ((o - mu) ** 2).mean(-1, keepdims=True)
    return (o - mu) * jax.lax.rsqrt(var + LN_EPS) * p["ln2_g"][0] + p["ln2_b"][0]


# ---------------------------------------------------------------------------
if __name__ == "__main__":
    B, L, T, H = 16, 4, 8, 32    # batch, num_layer, time, hidden_size
    A, O = 32, 16                # agg_size, output_size

    key = jax.random.PRNGKey(0)
    ks = jax.random.split(key, 12)

    def u(k, shape, scale=0.1):
        return jax.random.uniform(k, shape, jnp.float32, -scale, scale)

    params = {
        "w1":      u(ks[0], (L, H, A)),
        "b1":      u(ks[1], (L, 1, A)),
        "w2":      u(ks[2], (L, A, A)),
        "b2":      u(ks[3], (L, 1, A)),
        "ln_g":    jnp.ones((L, 1, A), jnp.float32),
        "ln_b":    jnp.zeros((L, 1, A), jnp.float32),
        "mmw":     u(ks[4], (L, 1, A), 0.5),          # per-layer ASP weights (num_head=1)
        "watt":    u(ks[5], (2 * A, 1), 0.5),         # AHP_W_att (stored transposed)
        "mmw_top": u(ks[6], (1, A), 0.5),             # top-level ASP weights
        "wlin":    u(ks[7], (2 * A, O)),
        "blin":    u(ks[8], (1, O)),
        "ln2_g":   jnp.ones((1, O), jnp.float32),
        "ln2_b":   jnp.zeros((1, O), jnp.float32),
    }

    x = jax.random.normal(ks[9], (B, L, T, H), jnp.float32)

    out = b_linear_forward(x, params)
    out = jax.block_until_ready(out)

    ref = b_linear_ref(x, params)
    assert out.shape == (B, O)
    assert jnp.allclose(out, ref, atol=1e-3, rtol=1e-3), (
        f"max abs err {jnp.max(jnp.abs(out - ref))}")

    print("KERNEL_OK")
</pallas_src>

<mosaic_0001>
module attributes {stable_mosaic.version = 11 : i64} {
  func.func @_fused_kernel(%arg0: i32, %arg1: memref<8x8x128xf32, #tpu.memory_space<vmem>>, %arg2: memref<128x128xf32, #tpu.memory_space<vmem>>, %arg3: memref<5x128x128xf32, #tpu.memory_space<vmem>>, %arg4: memref<16x128xf32, #tpu.memory_space<vmem>>, %arg5: memref<8x128xf32, #tpu.memory_space<vmem>>) attributes {dimension_semantics = [#tpu.dimension_semantics<parallel>], iteration_bounds = array<i64: 2>, scalar_prefetch = 0 : i64, scratch_operands = 0 : i64, tpu.core_type = #tpu.core_type<tc>, window_params = [{transform_indices = @transform_0, window_bounds = array<i64: 8, 8, 128>}, {pipeline_mode = #tpu.pipeline_mode<synchronous>, transform_indices = @transform_1, window_bounds = array<i64: 128, 128>}, {pipeline_mode = #tpu.pipeline_mode<synchronous>, transform_indices = @transform_2, window_bounds = array<i64: 5, 128, 128>}, {pipeline_mode = #tpu.pipeline_mode<synchronous>, transform_indices = @transform_3, window_bounds = array<i64: 16, 128>}, {transform_indices = @transform_4, window_bounds = array<i64: 8, 128>}]} {
    %c0 = arith.constant 0 : index
    %c0_0 = arith.constant 0 : index
    %0 = vector.load %arg2[%c0, %c0_0] : memref<128x128xf32, #tpu.memory_space<vmem>>, vector<128x128xf32>
    %c0_1 = arith.constant 0 : index
    %c0_2 = arith.constant 0 : index
    %c0_3 = arith.constant 0 : index
    %1 = vector.load %arg3[%c0_1, %c0_2, %c0_3] : memref<5x128x128xf32, #tpu.memory_space<vmem>>, vector<1x128x128xf32>
    %2 = vector.shape_cast %1 : vector<1x128x128xf32> to vector<128x128xf32>
    %c1 = arith.constant 1 : index
    %c0_4 = arith.constant 0 : index
    %c0_5 = arith.constant 0 : index
    %3 = vector.load %arg3[%c1, %c0_4, %c0_5] : memref<5x128x128xf32, #tpu.memory_space<vmem>>, vector<1x128x128xf32>
    %4 = vector.shape_cast %3 : vector<1x128x128xf32> to vector<128x128xf32>
    %c2 = arith.constant 2 : index
    %c0_6 = arith.constant 0 : index
    %c0_7 = arith.constant 0 : index
    %5 = vector.load %arg3[%c2, %c0_6, %c0_7] : memref<5x128x128xf32, #tpu.memory_space<vmem>>, vector<1x128x128xf32>
    %6 = vector.shape_cast %5 : vector<1x128x128xf32> to vector<128x128xf32>
    %c3 = arith.constant 3 : index
    %c0_8 = arith.constant 0 : index
    %c0_9 = arith.constant 0 : index
    %7 = vector.load %arg3[%c3, %c0_8, %c0_9] : memref<5x128x128xf32, #tpu.memory_space<vmem>>, vector<1x128x128xf32>
    %8 = vector.shape_cast %7 : vector<1x128x128xf32> to vector<128x128xf32>
    %c4 = arith.constant 4 : index
    %c0_10 = arith.constant 0 : index
    %c0_11 = arith.constant 0 : index
    %9 = vector.load %arg3[%c4, %c0_10, %c0_11] : memref<5x128x128xf32, #tpu.memory_space<vmem>>, vector<1x128x128xf32>
    %10 = vector.shape_cast %9 : vector<1x128x128xf32> to vector<128x128xf32>
    %c0_12 = arith.constant 0 : index
    %c0_13 = arith.constant 0 : index
    %11 = vector.load %arg4[%c0_12, %c0_13] : memref<16x128xf32, #tpu.memory_space<vmem>>, vector<1x128xf32>
    %c1_14 = arith.constant 1 : index
    %c0_15 = arith.constant 0 : index
    %12 = vector.load %arg4[%c1_14, %c0_15] : memref<16x128xf32, #tpu.memory_space<vmem>>, vector<1x128xf32>
    %c2_16 = arith.constant 2 : index
    %c0_17 = arith.constant 0 : index
    %13 = vector.load %arg4[%c2_16, %c0_17] : memref<16x128xf32, #tpu.memory_space<vmem>>, vector<1x128xf32>
    %c3_18 = arith.constant 3 : index
    %c0_19 = arith.constant 0 : index
    %14 = vector.load %arg4[%c3_18, %c0_19] : memref<16x128xf32, #tpu.memory_space<vmem>>, vector<1x128xf32>
    %c4_20 = arith.constant 4 : index
    %c0_21 = arith.constant 0 : index
    %15 = vector.load %arg4[%c4_20, %c0_21] : memref<16x128xf32, #tpu.memory_space<vmem>>, vector<1x128xf32>
    %c5 = arith.constant 5 : index
    %c0_22 = arith.constant 0 : index
    %16 = vector.load %arg4[%c5, %c0_22] : memref<16x128xf32, #tpu.memory_space<vmem>>, vector<1x128xf32>
    %c6 = arith.constant 6 : index
    %c0_23 = arith.constant 0 : index
    %17 = vector.load %arg4[%c6, %c0_23] : memref<16x128xf32, #tpu.memory_space<vmem>>, vector<1x128xf32>
    %c7 = arith.constant 7 : index
    %c0_24 = arith.constant 0 : index
    %18 = vector.load %arg4[%c7, %c0_24] : memref<16x128xf32, #tpu.memory_space<vmem>>, vector<1x128xf32>
    %c8 = arith.constant 8 : index
    %c0_25 = arith.constant 0 : index
    %19 = vector.load %arg4[%c8, %c0_25] : memref<16x128xf32, #tpu.memory_space<vmem>>, vector<1x128xf32>
    %c9 = arith.constant 9 : index
    %c0_26 = arith.constant 0 : index
    %20 = vector.load %arg4[%c9, %c0_26] : memref<16x128xf32, #tpu.memory_space<vmem>>, vector<1x128xf32>
    %c10 = arith.constant 10 : index
    %c0_27 = arith.constant 0 : index
    %21 = vector.load %arg4[%c10, %c0_27] : memref<16x128xf32, #tpu.memory_space<vmem>>, vector<1x128xf32>
    %c0_28 = arith.constant 0 : index
    %c0_29 = arith.constant 0 : index
    %c0_30 = arith.constant 0 : index
    %22 = vector.load %arg1[%c0_28, %c0_29, %c0_30] : memref<8x8x128xf32, #tpu.memory_space<vmem>>, vector<8x8x128xf32>
    %23 = vector.shape_cast %22 : vector<8x8x128xf32> to vector<64x128xf32>
    %cst = arith.constant dense<0.000000e+00> : vector<64x128xf32>
    %24 = tpu.matmul %23, %0, %cst {dimension_numbers = #tpu.dot_dimension_numbers<[1], [0], [0], [1], [0, 0, 1, 1], [], []>} : vector<64x128xf32>, vector<128x128xf32>, vector<64x128xf32> -> vector<64x128xf32>
    %25 = vector.broadcast %11 : vector<1x128xf32> to vector<64x128xf32>
    %26 = arith.addf %24, %25 : vector<64x128xf32>
    %cst_31 = arith.constant 0.000000e+00 : f32
    %27 = vector.broadcast %cst_31 : f32 to vector<64x128xf32>
    %28 = arith.maximumf %26, %27 : vector<64x128xf32>
    %cst_32 = arith.constant dense<0.000000e+00> : vector<64x128xf32>
    %29 = tpu.matmul %28, %2, %cst_32 {dimension_numbers = #tpu.dot_dimension_numbers<[1], [0], [0], [1], [0, 0, 1, 1], [], []>} : vector<64x128xf32>, vector<128x128xf32>, vector<64x128xf32> -> vector<64x128xf32>
    %30 = vector.broadcast %12 : vector<1x128xf32> to vector<64x128xf32>
    %31 = arith.addf %29, %30 : vector<64x128xf32>
    %cst_33 = arith.constant dense<0.000000e+00> : vector<64x128xf32>
    %32 = tpu.matmul %31, %4, %cst_33 {dimension_numbers = #tpu.dot_dimension_numbers<[1], [0], [0], [1], [0, 0, 1, 1], [], []>} : vector<64x128xf32>, vector<128x128xf32>, vector<64x128xf32> -> vector<64x128xf32>
    %cst_34 = arith.constant 3.125000e-02 : f32
    %33 = vector.broadcast %cst_34 : f32 to vector<64x128xf32>
    %34 = arith.mulf %32, %33 : vector<64x128xf32>
    %35 = arith.subf %31, %34 : vector<64x128xf32>
    %36 = arith.mulf %35, %35 : vector<64x128xf32>
    %cst_35 = arith.constant dense<0.000000e+00> : vector<64x128xf32>
    %37 = tpu.matmul %36, %4, %cst_35 {dimension_numbers = #tpu.dot_dimension_numbers<[1], [0], [0], [1], [0, 0, 1, 1], [], []>} : vector<64x128xf32>, vector<128x128xf32>, vector<64x128xf32> -> vector<64x128xf32>
    %cst_36 = arith.constant 3.125000e-02 : f32
    %38 = vector.broadcast %cst_36 : f32 to vector<64x128xf32>
    %39 = arith.mulf %37, %38 : vector<64x128xf32>
    %40 = arith.subf %31, %34 : vector<64x128xf32>
    %cst_37 = arith.constant 9.99999996E-13 : f32
    %41 = vector.broadcast %cst_37 : f32 to vector<64x128xf32>
    %42 = arith.addf %39, %41 : vector<64x128xf32>
    %43 = math.rsqrt %42 : vector<64x128xf32>
    %44 = arith.mulf %40, %43 : vector<64x128xf32>
    %45 = vector.broadcast %13 : vector<1x128xf32> to vector<64x128xf32>
    %46 = arith.mulf %44, %45 : vector<64x128xf32>
    %47 = vector.broadcast %14 : vector<1x128xf32> to vector<64x128xf32>
    %48 = arith.addf %46, %47 : vector<64x128xf32>
    %49 = vector.broadcast %15 : vector<1x128xf32> to vector<64x128xf32>
    %50 = arith.mulf %48, %49 : vector<64x128xf32>
    %cst_38 = arith.constant dense<0.000000e+00> : vector<64x128xf32>
    %51 = tpu.matmul %50, %4, %cst_38 {dimension_numbers = #tpu.dot_dimension_numbers<[1], [0], [0], [1], [0, 0, 1, 1], [], []>} : vector<64x128xf32>, vector<128x128xf32>, vector<64x128xf32> -> vector<64x128xf32>
    %52 = vector.shape_cast %48 : vector<64x128xf32> to vector<8x8x128xf32>
    %53 = math.tanh %51 : vector<64x128xf32>
    %54 = vector.shape_cast %53 : vector<64x128xf32> to vector<8x8x128xf32>
    %cst_39 = arith.constant dense<0xFF800000> : vector<8x128xf32>
    %55 = vector.multi_reduction <maximumf>, %54, %cst_39 [1] : vector<8x8x128xf32> to vector<8x128xf32>
    %56 = vector.shape_cast %55 : vector<8x128xf32> to vector<8x1x128xf32>
    %57 = vector.broadcast %56 : vector<8x1x128xf32> to vector<8x8x128xf32>
    %58 = arith.subf %54, %57 : vector<8x8x128xf32>
    %59 = math.exp %58 : vector<8x8x128xf32>
    %cst_40 = arith.constant dense<0.000000e+00> : vector<8x128xf32>
    %60 = vector.multi_reduction <add>, %59, %cst_40 [1] : vector<8x8x128xf32> to vector<8x128xf32>
    %61 = vector.shape_cast %60 : vector<8x128xf32> to vector<8x1x128xf32>
    %62 = vector.broadcast %61 : vector<8x1x128xf32> to vector<8x8x128xf32>
    %63 = arith.divf %59, %62 : vector<8x8x128xf32>
    %64 = arith.mulf %52, %63 : vector<8x8x128xf32>
    %cst_41 = arith.constant dense<0.000000e+00> : vector<8x128xf32>
    %65 = vector.multi_reduction <add>, %64, %cst_41 [1] : vector<8x8x128xf32> to vector<8x128xf32>
    %cst_42 = arith.constant dense<0.000000e+00> : vector<8x128xf32>
    %66 = vector.multi_reduction <add>, %64, %cst_42 [1] : vector<8x8x128xf32> to vector<8x128xf32>
    %67 = vector.shape_cast %66 : vector<8x128xf32> to vector<8x1x128xf32>
    %cst_43 = arith.constant 8.000000e+00 : f32
    %68 = vector.broadcast %cst_43 : f32 to vector<8x1x128xf32>
    %69 = arith.divf %67, %68 : vector<8x1x128xf32>
    %70 = vector.broadcast %69 : vector<8x1x128xf32> to vector<8x8x128xf32>
    %71 = arith.subf %64, %70 : vector<8x8x128xf32>
    %72 = arith.mulf %71, %71 : vector<8x8x128xf32>
    %cst_44 = arith.constant dense<0.000000e+00> : vector<8x128xf32>
    %73 = vector.multi_reduction <add>, %72, %cst_44 [1] : vector<8x8x128xf32> to vector<8x128xf32>
    %cst_45 = arith.constant 7.000000e+00 : f32
    %74 = vector.broadcast %cst_45 : f32 to vector<8x128xf32>
    %75 = arith.divf %73, %74 : vector<8x128xf32>
    %76 = math.sqrt %75 : vector<8x128xf32>
    %77 = vector.broadcast %16 : vector<1x128xf32> to vector<8x128xf32>
    %78 = arith.mulf %65, %77 : vector<8x128xf32>
    %79 = vector.broadcast %17 : vector<1x128xf32> to vector<8x128xf32>
    %80 = arith.mulf %76, %79 : vector<8x128xf32>
    %81 = arith.addf %78, %80 : vector<8x128xf32>
    %cst_46 = arith.constant dense<0.000000e+00> : vector<8x128xf32>
    %82 = tpu.matmul %81, %4, %cst_46 {dimension_numbers = #tpu.dot_dimension_numbers<[1], [0], [0], [1], [0, 0, 1, 1], [], []>} : vector<8x128xf32>, vector<128x128xf32>, vector<8x128xf32> -> vector<8x128xf32>
    %83 = math.tanh %82 : vector<8x128xf32>
    %cst_47 = arith.constant dense<0xFF800000> : vector<8xf32>
    %84 = vector.multi_reduction <maximumf>, %83, %cst_47 [1] : vector<8x128xf32> to vector<8xf32>
    %85 = vector.shape_cast %84 : vector<8xf32> to vector<8x1xf32>
    %86 = vector.broadcast %85 : vector<8x1xf32> to vector<8x128xf32>
    %87 = arith.subf %83, %86 : vector<8x128xf32>
    %88 = math.exp %87 : vector<8x128xf32>
    %cst_48 = arith.constant dense<0.000000e+00> : vector<8xf32>
    %89 = vector.multi_reduction <add>, %88, %cst_48 [1] : vector<8x128xf32> to vector<8xf32>
    %90 = vector.shape_cast %89 : vector<8xf32> to vector<8x1xf32>
    %cst_49 = arith.constant 3.125000e-02 : f32
    %91 = vector.broadcast %cst_49 : f32 to vector<8x1xf32>
    %92 = arith.mulf %90, %91 : vector<8x1xf32>
    %93 = vector.broadcast %92 : vector<8x1xf32> to vector<8x128xf32>
    %94 = arith.divf %88, %93 : vector<8x128xf32>
    %95 = vector.shape_cast %94 : vector<8x128xf32> to vector<8x1x128xf32>
    %96 = vector.broadcast %95 : vector<8x1x128xf32> to vector<8x8x128xf32>
    %97 = arith.mulf %52, %96 : vector<8x8x128xf32>
    %98 = vector.shape_cast %97 : vector<8x8x128xf32> to vector<64x128xf32>
    %cst_50 = arith.constant dense<0.000000e+00> : vector<64x128xf32>
    %99 = tpu.matmul %98, %6, %cst_50 {dimension_numbers = #tpu.dot_dimension_numbers<[1], [0], [0], [1], [0, 0, 1, 1], [], []>} : vector<64x128xf32>, vector<128x128xf32>, vector<64x128xf32> -> vector<64x128xf32>
    %100 = vector.shape_cast %99 : vector<64x128xf32> to vector<8x8x128xf32>
    %101 = vector.shape_cast %18 : vector<1x128xf32> to vector<1x1x128xf32>
    %102 = vector.broadcast %101 : vector<1x1x128xf32> to vector<8x8x128xf32>
    %103 = arith.mulf %100, %102 : vector<8x8x128xf32>
    %cst_51 = arith.constant dense<0.000000e+00> : vector<8x8xf32>
    %104 = vector.multi_reduction <add>, %103, %cst_51 [2] : vector<8x8x128xf32> to vector<8x8xf32>
    %105 = vector.shape_cast %104 : vector<8x8xf32> to vector<8x8x1xf32>
    %106 = math.tanh %105 : vector<8x8x1xf32>
    %cst_52 = arith.constant dense<0xFF800000> : vector<8x1xf32>
    %107 = vector.multi_reduction <maximumf>, %106, %cst_52 [1] : vector<8x8x1xf32> to vector<8x1xf32>
    %108 = vector.shape_cast %107 : vector<8x1xf32> to vector<8x1x1xf32>
    %109 = vector.broadcast %108 : vector<8x1x1xf32> to vector<8x8x1xf32>
    %110 = arith.subf %106, %109 : vector<8x8x1xf32>
    %111 = math.exp %110 : vector<8x8x1xf32>
    %cst_53 = arith.constant dense<0.000000e+00> : vector<8x1xf32>
    %112 = vector.multi_reduction <add>, %111, %cst_53 [1] : vector<8x8x1xf32> to vector<8x1xf32>
    %113 = vector.shape_cast %112 : vector<8x1xf32> to vector<8x1x1xf32>
    %114 = vector.broadcast %113 : vector<8x1x1xf32> to vector<8x8x1xf32>
    %115 = arith.divf %111, %114 : vector<8x8x1xf32>
    %116 = vector.broadcast %115 : vector<8x8x1xf32> to vector<8x8x128xf32>
    %117 = arith.mulf %100, %116 : vector<8x8x128xf32>
    %cst_54 = arith.constant dense<0.000000e+00> : vector<8x128xf32>
    %118 = vector.multi_reduction <add>, %117, %cst_54 [1] : vector<8x8x128xf32> to vector<8x128xf32>
    %cst_55 = arith.constant dense<0.000000e+00> : vector<8x128xf32>
    %119 = vector.multi_reduction <add>, %117, %cst_55 [1] : vector<8x8x128xf32> to vector<8x128xf32>
    %120 = vector.shape_cast %119 : vector<8x128xf32> to vector<8x1x128xf32>
    %cst_56 = arith.constant 8.000000e+00 : f32
    %121 = vector.broadcast %cst_56 : f32 to vector<8x1x128xf32>
    %122 = arith.divf %120, %121 : vector<8x1x128xf32>
    %123 = vector.broadcast %122 : vector<8x1x128xf32> to vector<8x8x128xf32>
    %124 = arith.subf %117, %123 : vector<8x8x128xf32>
    %125 = arith.mulf %124, %124 : vector<8x8x128xf32>
    %cst_57 = arith.constant dense<0.000000e+00> : vector<8x128xf32>
    %126 = vector.multi_reduction <add>, %125, %cst_57 [1] : vector<8x8x128xf32> to vector<8x128xf32>
    %cst_58 = arith.constant 7.000000e+00 : f32
    %127 = vector.broadcast %cst_58 : f32 to vector<8x128xf32>
    %128 = arith.divf %126, %127 : vector<8x128xf32>
    %129 = math.sqrt %128 : vector<8x128xf32>
    %cst_59 = arith.constant dense<0.000000e+00> : vector<8x128xf32>
    %130 = tpu.matmul %118, %8, %cst_59 {dimension_numbers = #tpu.dot_dimension_numbers<[1], [0], [0], [1], [0, 0, 1, 1], [], []>} : vector<8x128xf32>, vector<128x128xf32>, vector<8x128xf32> -> vector<8x128xf32>
    %cst_60 = arith.constant dense<0.000000e+00> : vector<8x128xf32>
    %131 = tpu.matmul %129, %10, %cst_60 {dimension_numbers = #tpu.dot_dimension_numbers<[1], [0], [0], [1], [0, 0, 1, 1], [], []>} : vector<8x128xf32>, vector<128x128xf32>, vector<8x128xf32> -> vector<8x128xf32>
    %132 = arith.addf %130, %131 : vector<8x128xf32>
    %133 = vector.broadcast %19 : vector<1x128xf32> to vector<8x128xf32>
    %134 = arith.addf %132, %133 : vector<8x128xf32>
    %cst_61 = arith.constant dense<0.000000e+00> : vector<8xf32>
    %135 = vector.multi_reduction <add>, %134, %cst_61 [1] : vector<8x128xf32> to vector<8xf32>
    %136 = vector.shape_cast %135 : vector<8xf32> to vector<8x1xf32>
    %cst_62 = arith.constant 1.280000e+02 : f32
    %137 = vector.broadcast %cst_62 : f32 to vector<8x1xf32>
    %138 = arith.divf %136, %137 : vector<8x1xf32>
    %139 = vector.broadcast %138 : vector<8x1xf32> to vector<8x128xf32>
    %140 = arith.subf %134, %139 : vector<8x128xf32>
    %141 = arith.mulf %140, %140 : vector<8x128xf32>
    %cst_63 = arith.constant dense<0.000000e+00> : vector<8xf32>
    %142 = vector.multi_reduction <add>, %141, %cst_63 [1] : vector<8x128xf32> to vector<8xf32>
    %143 = vector.shape_cast %142 : vector<8xf32> to vector<8x1xf32>
    %cst_64 = arith.constant 1.280000e+02 : f32
    %144 = vector.broadcast %cst_64 : f32 to vector<8x1xf32>
    %145 = arith.divf %143, %144 : vector<8x1xf32>
    %146 = vector.broadcast %138 : vector<8x1xf32> to vector<8x128xf32>
    %147 = arith.subf %134, %146 : vector<8x128xf32>
    %cst_65 = arith.constant 9.99999996E-13 : f32
    %148 = vector.broadcast %cst_65 : f32 to vector<8x1xf32>
    %149 = arith.addf %145, %148 : vector<8x1xf32>
    %150 = math.rsqrt %149 : vector<8x1xf32>
    %151 = vector.broadcast %150 : vector<8x1xf32> to vector<8x128xf32>
    %152 = arith.mulf %147, %151 : vector<8x128xf32>
    %153 = vector.broadcast %20 : vector<1x128xf32> to vector<8x128xf32>
    %154 = arith.mulf %152, %153 : vector<8x128xf32>
    %155 = vector.broadcast %21 : vector<1x128xf32> to vector<8x128xf32>
    %156 = arith.addf %154, %155 : vector<8x128xf32>
    %c0_66 = arith.constant 0 : index
    %c0_67 = arith.constant 0 : index
    %157 = vector.load %arg5[%c0_66, %c0_67] : memref<8x128xf32, #tpu.memory_space<vmem>>, vector<8x128xf32>
    tpu.vector_store %arg5[%c0_66, %c0_67], %156 {strides = array<i32>} : memref<8x128xf32, #tpu.memory_space<vmem>>, vector<8x128xf32>,
    return
  }
  func.func @transform_0(%arg0: i32) -> (i32, i32, i32) {
    %c0_i32 = arith.constant 0 : i32
    %c0_i32_0 = arith.constant 0 : i32
    %c0_i32_1 = arith.constant 0 : i32
    return %arg0, %c0_i32, %c0_i32_0 : i32, i32, i32
  }
  func.func @transform_1(%arg0: i32) -> (i32, i32) {
    %c0_i32 = arith.constant 0 : i32
    %c0_i32_0 = arith.constant 0 : i32
    %c0_i32_1 = arith.constant 0 : i32
    return %c0_i32, %c0_i32_0 : i32, i32
  }
  func.func @transform_2(%arg0: i32) -> (i32, i32, i32) {
    %c0_i32 = arith.constant 0 : i32
    %c0_i32_0 = arith.constant 0 : i32
    %c0_i32_1 = arith.constant 0 : i32
    %c0_i32_2 = arith.constant 0 : i32
    return %c0_i32, %c0_i32_0, %c0_i32_1 : i32, i32, i32
  }
  func.func @transform_3(%arg0: i32) -> (i32, i32) {
    %c0_i32 = arith.constant 0 : i32
    %c0_i32_0 = arith.constant 0 : i32
    %c0_i32_1 = arith.constant 0 : i32
    return %c0_i32, %c0_i32_0 : i32, i32
  }
  func.func @transform_4(%arg0: i32) -> (i32, i32) {
    %c0_i32 = arith.constant 0 : i32
    %c0_i32_0 = arith.constant 0 : i32
    return %arg0, %c0_i32 : i32, i32
  }
}

</mosaic_0001>

<llo_original>
// kernel: tpu_custom_call.1
$region0: #{tpu_custom_call.1}
  #allocation0 [shape = 'u32[]', space=smem, size = 0x4, offset = 0x4, fixed_abs, tag = 'smem constant byte address 0x4 - core index']
  #allocation1 [shape = 'u32[144,128]{1,0:T(1,128)}', space=vmem, size = 0x12000, scoped, tag = 'internal scratch']
  %s0 = inlined_call_operand.hbm [shape: f32[16,8,128], index: 0, kind: input, shape index: {}]
  %s1 = inlined_call_operand.hbm [shape: f32[128,128], index: 1, kind: input, shape index: {}]
  %s2 = inlined_call_operand.hbm [shape: f32[5,128,128], index: 2, kind: input, shape index: {}]
  %s3 = inlined_call_operand.hbm [shape: f32[16,128], index: 3, kind: input, shape index: {}]
  %s4 = inlined_call_operand.hbm [shape: f32[16,128], index: 4, kind: output, shape index: {}]
  %s5 = sld [smem:[#allocation0]]
  $region65: #{tpu_custom_call.1} parent=0
    _
  %s7 = ssub.s32 1, %s5
  %s8 = scalar_select 0, %s7, %s5
  $region1: #{tpu_custom_call.1} parent=0
    #allocation2 [shape = 'u8[65536]{0}', space=vmem, size = 0x10000, scoped, tag = 'input window, operand 0']
    #allocation3 [shape = 's32[2]{0}', space=sflag, size = 0x8, scoped, tag = 'scoped memory for tpu_custom_call.1']
    #allocation4 [shape = 's32[2]{0}', space=sflag, size = 0x8, scoped, tag = 'scoped memory for tpu_custom_call.1']
    #allocation5 [shape = 'u8[65536]{0}', space=vmem, size = 0x10000, scoped, tag = 'input window, operand 1, single buffered']
    #allocation6 [shape = 's32[1]{0}', space=sflag, size = 0x4, scoped, tag = 'scoped memory for tpu_custom_call.1']
    #allocation7 [shape = 'u8[327680]{0}', space=vmem, size = 0x50000, scoped, tag = 'input window, operand 2, single buffered']
    #allocation8 [shape = 'u8[8192]{0}', space=vmem, size = 0x2000, scoped, tag = 'input window, operand 3, single buffered']
    #allocation9 [shape = 's32[1]{0}', space=sflag, size = 0x4, scoped, tag = 'scoped memory for tpu_custom_call.1']
    #allocation10 [shape = 'u8[8192]{0}', space=vmem, size = 0x2000, scoped, tag = 'output window, operand 0']
    %9 = vsyncpa [#allocation3], 0
    %s10 = scalar_lea.sflag [#allocation3], 1
    %11 = vsyncpa %s10, 0
    %12 = vsyncpa [#allocation6], 0
    %13 = vsyncpa [#allocation9], 0
    %14 = vsyncpa [#allocation4], 0
    %s15 = scalar_lea.sflag [#allocation4], 1
    %16 = vsyncpa %s15, 0
    loop: start=0, step=1, limit=4
    $region2: #{tpu_custom_call.1} parent=1 // loop_pre_header
      _
    $region3: #{tpu_custom_call.1} parent=1 // loop_header
      %s18 = sphi 0, %s22
      %p19 = scmp.ge.s32.totalorder %s18, 4
      %s28 = sphi 0, %s30
      %s31 = sphi 0, %s28
      %s32 = sphi 0, %s31
      %s48 = sphi 0, %s32
      %s52 = sphi 0, %s52
      %s54 = sphi 0, %s52
      %s55 = sphi 0, %s54
      %s69 = sphi 0, %s55
      %s73 = sphi 0, %s73
      %s75 = sphi 0, %s73
      %s76 = sphi 0, %s75
      %s90 = sphi 0, %s76
      %s94 = sphi 0, %s94
      %s96 = sphi 0, %s94
      %s97 = sphi 0, %s96
      %s111 = sphi 0, %s97
      %s117 = sphi 0, %s119
      %s120 = sphi 0, %s117
      %s121 = sphi 0, %s120
      %s137 = sphi 0, %s121
    $region4: #{tpu_custom_call.1} parent=1 // loop_header_branch
      %21 = sbr.rel (%p19) target = $region8
    $region5: #{tpu_custom_call.1} parent=1 // loop_body
      %s23 = ssub.s32 %s18, 1
      %s24 = ssub.s32 %s18, 2
      %s25 = sadd.s32 %s18, 1
      %s26 = ssub.s32 %s18, %s25
      %p27 = scmp.eq.s32.totalorder %s26, 0
      %s29 = sadd.s32 %s28, 1
      %s30 = scalar_select %p27, %s28, %s29
      %p33 = pneg %p27
      %p34 = scmp.eq.s32.totalorder %s18, 1
      %p35 = por %p33, %p34
      %p36 = scmp.ne.s32.totalorder %s28, %s31
      %p37 = scmp.eq.s32.totalorder %s18, 0
      %p38 = por %p36, %p37
      %p39 = scmp.ne.s32.totalorder %s28, %s31
      %p40 = scmp.eq.s32.totalorder %s23, 1
      %p41 = por %p39, %p40
      %p42 = scmp.ne.s32.totalorder %s31, %s32
      %p43 = scmp.eq.s32.totalorder %s23, 0
      %p44 = por %p42, %p43
      %p45 = scmp.ne.s32.totalorder %s31, %s32
      %p46 = scmp.eq.s32.totalorder %s24, 1
      %p47 = por %p45, %p46
      %p49 = scmp.ne.s32.totalorder %s32, %s48
      %p50 = scmp.eq.s32.totalorder %s24, 0
      %p51 = por %p49, %p50
      %s53 = sadd.s32 %s52, 1
      %p56 = scmp.eq.s32.totalorder %s18, 1
      %p57 = scmp.ne.s32.totalorder %s52, %s54
      %p58 = scmp.eq.s32.totalorder %s18, 0
      %p59 = por %p57, %p58
      %p60 = scmp.ne.s32.totalorder %s52, %s54
      %p61 = scmp.eq.s32.totalorder %s23, 1
      %p62 = por %p60, %p61
      %p63 = scmp.ne.s32.totalorder %s54, %s55
      %p64 = scmp.eq.s32.totalorder %s23, 0
      %p65 = por %p63, %p64
      %p66 = scmp.ne.s32.totalorder %s54, %s55
      %p67 = scmp.eq.s32.totalorder %s24, 1
      %p68 = por %p66, %p67
      %p70 = scmp.ne.s32.totalorder %s55, %s69
      %p71 = scmp.eq.s32.totalorder %s24, 0
      %p72 = por %p70, %p71
      %s74 = sadd.s32 %s73, 1
      %p77 = scmp.eq.s32.totalorder %s18, 1
      %p78 = scmp.ne.s32.totalorder %s73, %s75
      %p79 = scmp.eq.s32.totalorder %s18, 0
      %p80 = por %p78, %p79
      %p81 = scmp.ne.s32.totalorder %s73, %s75
      %p82 = scmp.eq.s32.totalorder %s23, 1
      %p83 = por %p81, %p82
      %p84 = scmp.ne.s32.totalorder %s75, %s76
      %p85 = scmp.eq.s32.totalorder %s23, 0
      %p86 = por %p84, %p85
      %p87 = scmp.ne.s32.totalorder %s75, %s76
      %p88 = scmp.eq.s32.totalorder %s24, 1
      %p89 = por %p87, %p88
      %p91 = scmp.ne.s32.totalorder %s76, %s90
      %p92 = scmp.eq.s32.totalorder %s24, 0
      %p93 = por %p91, %p92
      %s95 = sadd.s32 %s94, 1
      %p98 = scmp.eq.s32.totalorder %s18, 1
      %p99 = scmp.ne.s32.totalorder %s94, %s96
      %p100 = scmp.eq.s32.totalorder %s18, 0
      %p101 = por %p99, %p100
      %p102 = scmp.ne.s32.totalorder %s94, %s96
      %p103 = scmp.eq.s32.totalorder %s23, 1
      %p104 = por %p102, %p103
      %p105 = scmp.ne.s32.totalorder %s96, %s97
      %p106 = scmp.eq.s32.totalorder %s23, 0
      %p107 = por %p105, %p106
      %p108 = scmp.ne.s32.totalorder %s96, %s97
      %p109 = scmp.eq.s32.totalorder %s24, 1
      %p110 = por %p108, %p109
      %p112 = scmp.ne.s32.totalorder %s97, %s111
      %p113 = scmp.eq.s32.totalorder %s24, 0
      %p114 = por %p112, %p113
      %s115 = ssub.s32 %s18, %s25
      %p116 = scmp.eq.s32.totalorder %s115, 0
      %s118 = sadd.s32 %s117, 1
      %s119 = scalar_select %p116, %s117, %s118
      %p122 = pneg %p116
      %p123 = scmp.eq.s32.totalorder %s18, 1
      %p124 = por %p122, %p123
      %p125 = scmp.ne.s32.totalorder %s117, %s120
      %p126 = scmp.eq.s32.totalorder %s18, 0
      %p127 = por %p125, %p126
      %p128 = scmp.ne.s32.totalorder %s117, %s120
      %p129 = scmp.eq.s32.totalorder %s23, 1
      %p130 = por %p128, %p129
      %p131 = scmp.ne.s32.totalorder %s120, %s121
      %p132 = scmp.eq.s32.totalorder %s23, 0
      %p133 = por %p131, %p132
      %p134 = scmp.ne.s32.totalorder %s120, %s121
      %p135 = scmp.eq.s32.totalorder %s24, 1
      %p136 = por %p134, %p135
      %p138 = scmp.ne.s32.totalorder %s121, %s137
      %p139 = scmp.eq.s32.totalorder %s24, 0
      %p140 = por %p138, %p139
      %p141 = scmp.le.s32.totalorder 1, %s18
      %p142 = scmp.lt.s32.totalorder %s18, 3
      %p143 = pnand %p141, %p142
      %p144 = pneg %p143
      // Predicated region
      $region9: #{tpu_custom_call.1} parent=5 // pred_check
        _
      $region10: #{tpu_custom_call.1} parent=5 // pred_check_branch
        %146 = sbr.rel (%p143) target = $region12
      $region11: #{tpu_custom_call.1} parent=5 // pred_region
        %s147 = ssub.s32 %s18, 1
        // Predicated region
        $region13: #{tpu_custom_call.1} parent=11 // pred_check
          %p148 = pneg %p65
        $region14: #{tpu_custom_call.1} parent=11 // pred_check_branch
          %150 = sbr.rel (%p148) target = $region16
        $region15: #{tpu_custom_call.1} parent=11 // pred_region
          %s152 = ssub.s32 2048, 2048
          %153 = vsyncadd [#allocation6], %s152
          %s154 = sshll.u32 [#allocation5], 4
          %s155 = int_to_ptr.vmem [resolvable:$true] %s154
          %160 = dma.hbm_to_vmem [thread:$0]  %s1, 2048, %s155, [#allocation6], 128, 128, 8
        $region16: #{tpu_custom_call.1} parent=11 // pred_fallthru
          _
        // Predicated region
        $region17: #{tpu_custom_call.1} parent=11 // pred_check
          %p161 = pneg %p86
        $region18: #{tpu_custom_call.1} parent=11 // pred_check_branch
          %163 = sbr.rel (%p161) target = $region20
        $region19: #{tpu_custom_call.1} parent=11 // pred_region
          %s165 = ssub.s32 10240, 10240
          %166 = vsyncadd [#allocation6], %s165
          %s167 = sshll.u32 [#allocation7], 4
          %s168 = int_to_ptr.vmem [resolvable:$true] %s167
          %173 = dma.hbm_to_vmem [thread:$0]  %s2, 10240, %s168, [#allocation6], 128, 128, 8
        $region20: #{tpu_custom_call.1} parent=11 // pred_fallthru
          _
        // Predicated region
        $region21: #{tpu_custom_call.1} parent=11 // pred_check
          %p174 = pneg %p107
        $region22: #{tpu_custom_call.1} parent=11 // pred_check_branch
          %176 = sbr.rel (%p174) target = $region24
        $region23: #{tpu_custom_call.1} parent=11 // pred_region
          %s178 = ssub.s32 256, 256
          %179 = vsyncadd [#allocation9], %s178
          %s180 = sshll.u32 [#allocation8], 4
          %s181 = int_to_ptr.vmem [resolvable:$true] %s180
          %186 = dma.hbm_to_vmem [thread:$0]  %s3, 256, %s181, [#allocation9], 128, 128, 8
        $region24: #{tpu_custom_call.1} parent=11 // pred_fallthru
          _
      $region12: #{tpu_custom_call.1} parent=5 // pred_fallthru
        _
      %p187 = scmp.lt.s32.totalorder %s18, 2
      // Predicated region
      $region25: #{tpu_custom_call.1} parent=5 // pred_check
        %p188 = pneg %p187
      $region26: #{tpu_custom_call.1} parent=5 // pred_check_branch
        %190 = sbr.rel (%p188) target = $region28
      $region27: #{tpu_custom_call.1} parent=5 // pred_region
        // Predicated region
        $region29: #{tpu_custom_call.1} parent=27 // pred_check
          %p191 = pneg %p38
        $region30: #{tpu_custom_call.1} parent=27 // pred_check_branch
          %193 = sbr.rel (%p191) target = $region32
        $region31: #{tpu_custom_call.1} parent=27 // pred_region
          %s194 = sand.u32 %s28, 1
          %s195 = scalar_lea.sflag [#allocation3], %s194
          %s196 = sand.u32 %s28, 1
          %s197 = smul.addr %s196, 64
          %s198 = scalar_lea.vmem [#allocation2], %s197
          %s199 = smul.u32 8, %s18
          %s201 = ssub.s32 1024, 1024
          %202 = vsyncadd %s195, %s201
          %s203 = smul.addr %s199, 128
          %s204 = scalar_lea.hbm %s0, %s203
          %s205 = sshll.u32 %s198, 4
          %s206 = int_to_ptr.vmem [resolvable:$true] %s205
          %211 = dma.hbm_to_vmem [thread:$0]  %s204, 1024, %s206, %s195, 128, 128, 8
        $region32: #{tpu_custom_call.1} parent=27 // pred_fallthru
          _
      $region28: #{tpu_custom_call.1} parent=5 // pred_fallthru
        _
      %p212 = scmp.le.s32.totalorder 1, %s18
      %p213 = scmp.lt.s32.totalorder %s18, 3
      %p214 = pnand %p212, %p213
      %p215 = pneg %p214
      // Predicated region
      $region33: #{tpu_custom_call.1} parent=5 // pred_check
        _
      $region34: #{tpu_custom_call.1} parent=5 // pred_check_branch
        %217 = sbr.rel (%p214) target = $region36
      $region35: #{tpu_custom_call.1} parent=5 // pred_region
        %s218 = ssub.s32 %s18, 1
        %s219 = sand.u32 %s31, 1
        %s220 = scalar_lea.sflag [#allocation3], %s219
        %s221 = sand.u32 %s31, 1
        %s222 = smul.addr %s221, 64
        %s223 = scalar_lea.vmem [#allocation2], %s222
        // Predicated region
        $region37: #{tpu_custom_call.1} parent=35 // pred_check
          %p224 = pneg %p44
        $region38: #{tpu_custom_call.1} parent=35 // pred_check_branch
          %226 = sbr.rel (%p224) target = $region40
        $region39: #{tpu_custom_call.1} parent=35 // pred_region
          %227 = dma.done %s220, 1024
        $region40: #{tpu_custom_call.1} parent=35 // pred_fallthru
          _
        // Predicated region
        $region41: #{tpu_custom_call.1} parent=35 // pred_check
          %p228 = pneg %p65
        $region42: #{tpu_custom_call.1} parent=35 // pred_check_branch
          %230 = sbr.rel (%p228) target = $region44
        $region43: #{tpu_custom_call.1} parent=35 // pred_region
          %231 = dma.done [#allocation6], 2048
        $region44: #{tpu_custom_call.1} parent=35 // pred_fallthru
          _
        // Predicated region
        $region45: #{tpu_custom_call.1} parent=35 // pred_check
          %p232 = pneg %p86
        $region46: #{tpu_custom_call.1} parent=35 // pred_check_branch
          %234 = sbr.rel (%p232) target = $region48
        $region47: #{tpu_custom_call.1} parent=35 // pred_region
          %235 = dma.done [#allocation6], 10240
        $region48: #{tpu_custom_call.1} parent=35 // pred_fallthru
          _
        // Predicated region
        $region49: #{tpu_custom_call.1} parent=35 // pred_check
          %p236 = pneg %p107
        $region50: #{tpu_custom_call.1} parent=35 // pred_check_branch
          %238 = sbr.rel (%p236) target = $region52
        $region51: #{tpu_custom_call.1} parent=35 // pred_region
          %239 = dma.done [#allocation9], 256
        $region52: #{tpu_custom_call.1} parent=35 // pred_fallthru
          _
        %s240 = sand.u32 %s31, 1
        %s241 = scalar_lea.sflag [#allocation3], %s240
        %s242 = sand.u32 %s31, 1
        %s243 = smul.addr %s242, 64
        %s244 = scalar_lea.vmem [#allocation2], %s243
        %p245 = pneg %p44
        %p246 = pneg %p41
        %p247 = pneg %p65
        %p248 = pneg %p62
        %p249 = pneg %p86
        %p250 = pneg %p83
        %p251 = pneg %p107
        %p252 = pneg %p104
        %p253 = pneg %p133
        %p254 = pneg %p130
        %s255 = sand.u32 %s120, 1
        %s256 = scalar_lea.sflag [#allocation4], %s255
        %s257 = sand.u32 %s120, 1
        %s258 = smul.addr %s257, 8
        %s259 = scalar_lea.vmem [#allocation10], %s258
        %s260 = smul.u32 8, %s23
        %v261 = vld [vmem:[#allocation5] sm:$0xff]
        %v262 = vld [vmem:[#allocation5 + $0x8] sm:$0xff]
        %v263 = vld [vmem:[#allocation5 + $0x10] sm:$0xff]
        %v264 = vld [vmem:[#allocation5 + $0x18] sm:$0xff]
        %v265 = vld [vmem:[#allocation5 + $0x20] sm:$0xff]
        %v266 = vld [vmem:[#allocation5 + $0x28] sm:$0xff]
        %v267 = vld [vmem:[#allocation5 + $0x30] sm:$0xff]
        %v268 = vld [vmem:[#allocation5 + $0x38] sm:$0xff]
        %v269 = vld [vmem:[#allocation5 + $0x40] sm:$0xff]
        %v270 = vld [vmem:[#allocation5 + $0x48] sm:$0xff]
        %v271 = vld [vmem:[#allocation5 + $0x50] sm:$0xff]
        %v272 = vld [vmem:[#allocation5 + $0x58] sm:$0xff]
        %v273 = vld [vmem:[#allocation5 + $0x60] sm:$0xff]
        %v274 = vld [vmem:[#allocation5 + $0x68] sm:$0xff]
        %v275 = vld [vmem:[#allocation5 + $0x70] sm:$0xff]
        %v276 = vld [vmem:[#allocation5 + $0x78] sm:$0xff]
        %v277 = vld [vmem:[#allocation7] sm:$0xff]
        %v278 = vld [vmem:[#allocation7 + $0x8] sm:$0xff]
        %v279 = vld [vmem:[#allocation7 + $0x10] sm:$0xff]
        %v280 = vld [vmem:[#allocation7 + $0x18] sm:$0xff]
        %v281 = vld [vmem:[#allocation7 + $0x20] sm:$0xff]
        %v282 = vld [vmem:[#allocation7 + $0x28] sm:$0xff]
        %v283 = vld [vmem:[#allocation7 + $0x30] sm:$0xff]
        %v284 = vld [vmem:[#allocation7 + $0x38] sm:$0xff]
        %v285 = vld [vmem:[#allocation7 + $0x40] sm:$0xff]
        %v286 = vld [vmem:[#allocation7 + $0x48] sm:$0xff]
        %v287 = vld [vmem:[#allocation7 + $0x50] sm:$0xff]
        %v288 = vld [vmem:[#allocation7 + $0x58] sm:$0xff]
        %v289 = vld [vmem:[#allocation7 + $0x60] sm:$0xff]
        %v290 = vld [vmem:[#allocation7 + $0x68] sm:$0xff]
        %v291 = vld [vmem:[#allocation7 + $0x70] sm:$0xff]
        %v292 = vld [vmem:[#allocation7 + $0x78] sm:$0xff]
        %s293 = scalar_lea.vmem [#allocation7], 128
        %v294 = vld [vmem:[%s293] sm:$0xff]
        %v295 = vld [vmem:[%s293 + $0x8] sm:$0xff]
        %v296 = vld [vmem:[%s293 + $0x10] sm:$0xff]
        %v297 = vld [vmem:[%s293 + $0x18] sm:$0xff]
        %v298 = vld [vmem:[%s293 + $0x20] sm:$0xff]
        %v299 = vld [vmem:[%s293 + $0x28] sm:$0xff]
        %v300 = vld [vmem:[%s293 + $0x30] sm:$0xff]
        %v301 = vld [vmem:[%s293 + $0x38] sm:$0xff]
        %v302 = vld [vmem:[%s293 + $0x40] sm:$0xff]
        %v303 = vld [vmem:[%s293 + $0x48] sm:$0xff]
        %v304 = vld [vmem:[%s293 + $0x50] sm:$0xff]
        %v305 = vld [vmem:[%s293 + $0x58] sm:$0xff]
        %v306 = vld [vmem:[%s293 + $0x60] sm:$0xff]
        %v307 = vld [vmem:[%s293 + $0x68] sm:$0xff]
        %v308 = vld [vmem:[%s293 + $0x70] sm:$0xff]
        %v309 = vld [vmem:[%s293 + $0x78] sm:$0xff]
        %s310 = scalar_lea.vmem [#allocation7], 256
        %v311 = vld [vmem:[%s310] sm:$0xff]
        %v312 = vld [vmem:[%s310 + $0x8] sm:$0xff]
        %v313 = vld [vmem:[%s310 + $0x10] sm:$0xff]
        %v314 = vld [vmem:[%s310 + $0x18] sm:$0xff]
        %v315 = vld [vmem:[%s310 + $0x20] sm:$0xff]
        %v316 = vld [vmem:[%s310 + $0x28] sm:$0xff]
        %v317 = vld [vmem:[%s310 + $0x30] sm:$0xff]
        %v318 = vld [vmem:[%s310 + $0x38] sm:$0xff]
        %v319 = vld [vmem:[%s310 + $0x40] sm:$0xff]
        %v320 = vld [vmem:[%s310 + $0x48] sm:$0xff]
        %v321 = vld [vmem:[%s310 + $0x50] sm:$0xff]
        %v322 = vld [vmem:[%s310 + $0x58] sm:$0xff]
        %v323 = vld [vmem:[%s310 + $0x60] sm:$0xff]
        %v324 = vld [vmem:[%s310 + $0x68] sm:$0xff]
        %v325 = vld [vmem:[%s310 + $0x70] sm:$0xff]
        %v326 = vld [vmem:[%s310 + $0x78] sm:$0xff]
        %s327 = scalar_lea.vmem [#allocation7], 384
        %v328 = vld [vmem:[%s327] sm:$0xff]
        %v329 = vld [vmem:[%s327 + $0x8] sm:$0xff]
        %v330 = vld [vmem:[%s327 + $0x10] sm:$0xff]
        %v331 = vld [vmem:[%s327 + $0x18] sm:$0xff]
        %v332 = vld [vmem:[%s327 + $0x20] sm:$0xff]
        %v333 = vld [vmem:[%s327 + $0x28] sm:$0xff]
        %v334 = vld [vmem:[%s327 + $0x30] sm:$0xff]
        %v335 = vld [vmem:[%s327 + $0x38] sm:$0xff]
        %v336 = vld [vmem:[%s327 + $0x40] sm:$0xff]
        %v337 = vld [vmem:[%s327 + $0x48] sm:$0xff]
        %v338 = vld [vmem:[%s327 + $0x50] sm:$0xff]
        %v339 = vld [vmem:[%s327 + $0x58] sm:$0xff]
        %v340 = vld [vmem:[%s327 + $0x60] sm:$0xff]
        %v341 = vld [vmem:[%s327 + $0x68] sm:$0xff]
        %v342 = vld [vmem:[%s327 + $0x70] sm:$0xff]
        %v343 = vld [vmem:[%s327 + $0x78] sm:$0xff]
        %s344 = scalar_lea.vmem [#allocation7], 512
        %v345 = vld [vmem:[%s344] sm:$0xff]
        %v346 = vld [vmem:[%s344 + $0x8] sm:$0xff]
        %v347 = vld [vmem:[%s344 + $0x10] sm:$0xff]
        %v348 = vld [vmem:[%s344 + $0x18] sm:$0xff]
        %v349 = vld [vmem:[%s344 + $0x20] sm:$0xff]
        %v350 = vld [vmem:[%s344 + $0x28] sm:$0xff]
        %v351 = vld [vmem:[%s344 + $0x30] sm:$0xff]
        %v352 = vld [vmem:[%s344 + $0x38] sm:$0xff]
        %v353 = vld [vmem:[%s344 + $0x40] sm:$0xff]
        %v354 = vld [vmem:[%s344 + $0x48] sm:$0xff]
        %v355 = vld [vmem:[%s344 + $0x50] sm:$0xff]
        %v356 = vld [vmem:[%s344 + $0x58] sm:$0xff]
        %v357 = vld [vmem:[%s344 + $0x60] sm:$0xff]
        %v358 = vld [vmem:[%s344 + $0x68] sm:$0xff]
        %v359 = vld [vmem:[%s344 + $0x70] sm:$0xff]
        %v360 = vld [vmem:[%s344 + $0x78] sm:$0xff]
        %v361 = vld [vmem:[#allocation8] sm:$0x1]
        %v362 = vld [vmem:[#allocation8 + $0x1] sm:$0x1]
        %v363 = vld [vmem:[#allocation8 + $0x2] sm:$0x1]
        %v364 = vld [vmem:[#allocation8 + $0x3] sm:$0x1]
        %v365 = vld [vmem:[#allocation8 + $0x4] sm:$0x1]
        %v366 = vld [vmem:[#allocation8 + $0x5] sm:$0x1]
        %v367 = vld [vmem:[#allocation8 + $0x6] sm:$0x1]
        %v368 = vld [vmem:[#allocation8 + $0x7] sm:$0x1]
        %v369 = vld [vmem:[#allocation8 + $0x8] sm:$0x1]
        %v370 = vld [vmem:[#allocation8 + $0x9] sm:$0x1]
        %v371 = vld [vmem:[#allocation8 + $0xa] sm:$0x1]
        %v372 = vld [vmem:[%s223] sm:$0xff]
        %v373 = vld [vmem:[%s223 + $0x8] sm:$0xff]
        %v374 = vld [vmem:[%s223 + $0x10] sm:$0xff]
        %v375 = vld [vmem:[%s223 + $0x18] sm:$0xff]
        %v376 = vld [vmem:[%s223 + $0x20] sm:$0xff]
        %v377 = vld [vmem:[%s223 + $0x28] sm:$0xff]
        %v378 = vld [vmem:[%s223 + $0x30] sm:$0xff]
        %v379 = vld [vmem:[%s223 + $0x38] sm:$0xff]
        %v380 = vlaneseq
        %v381 = vshrl.u32 %v380, 7
        %v382 = vsub.s32 0, %v381
        %v383 = vrot.slane %v361, %v382
        %384 = vmatprep.subr.mxu0 0.0
        %385 = vmatpush1.msra.mxu0 %v261
        %386 = vmatprep.subr.mxu0 0.0
        %387 = vmatpush1.msra.mxu0 %v262
        %388 = vmatprep.subr.mxu0 0.0
        %389 = vmatpush1.msra.mxu0 %v263
        %390 = vmatprep.subr.mxu0 0.0
        %391 = vmatpush1.msra.mxu0 %v264
        %392 = vmatprep.subr.mxu0 0.0
        %393 = vmatpush1.msra.mxu0 %v265
        %394 = vmatprep.subr.mxu0 0.0
        %395 = vmatpush1.msra.mxu0 %v266
        %396 = vmatprep.subr.mxu0 0.0
        %397 = vmatpush1.msra.mxu0 %v267
        %398 = vmatprep.subr.mxu0 0.0
        %399 = vmatpush1.msra.mxu0 %v268
        %400 = vmatprep.subr.mxu0 0.0
        %401 = vmatpush1.msra.mxu0 %v269
        %402 = vmatprep.subr.mxu0 0.0
        %403 = vmatpush1.msra.mxu0 %v270
        %404 = vmatprep.subr.mxu0 0.0
        %405 = vmatpush1.msra.mxu0 %v271
        %406 = vmatprep.subr.mxu0 0.0
        %407 = vmatpush1.msra.mxu0 %v272
        %408 = vmatprep.subr.mxu0 0.0
        %409 = vmatpush1.msra.mxu0 %v273
        %410 = vmatprep.subr.mxu0 0.0
        %411 = vmatpush1.msra.mxu0 %v274
        %412 = vmatprep.subr.mxu0 0.0
        %413 = vmatpush1.msra.mxu0 %v275
        %414 = vmatprep.subr.mxu0 0.0
        %415 = vmatpush1.msra.mxu0 %v276
        %416 = vmatprep.subr.mxu0 0.0
        %417 = vmatpush1.msra.mxu0 0.0
        %418 = vmatprep.subr.mxu0 0.0
        %419 = vmatpush1.msra.mxu0 0.0
        %420 = vmatprep.subr.mxu0 0.0
        %421 = vmatpush1.msra.mxu0 0.0
        %422 = vmatprep.subr.mxu0 0.0
        %423 = vmatpush1.msra.mxu0 0.0
        %424 = vmatprep.subr.mxu0 0.0
        %425 = vmatpush1.msra.mxu0 0.0
        %426 = vmatprep.subr.mxu0 0.0
        %427 = vmatpush1.msra.mxu0 0.0
        %428 = vmatprep.subr.mxu0 0.0
        %429 = vmatpush1.msra.mxu0 0.0
        %430 = vmatprep.subr.mxu0 0.0
        %431 = vmatpush1.msra.mxu0 0.0
        %432 = vmatprep.subr.mxu0 0.0
        %433 = vmatpush1.msra.mxu0 0.0
        %434 = vmatprep.subr.mxu0 0.0
        %435 = vmatpush1.msra.mxu0 0.0
        %436 = vmatprep.subr.mxu0 0.0
        %437 = vmatpush1.msra.mxu0 0.0
        %438 = vmatprep.subr.mxu0 0.0
        %439 = vmatpush1.msra.mxu0 0.0
        %440 = vmatprep.subr.mxu0 0.0
        %441 = vmatpush1.msra.mxu0 0.0
        %442 = vmatprep.subr.mxu0 0.0
        %443 = vmatpush1.msra.mxu0 0.0
        %444 = vmatprep.subr.mxu0 0.0
        %445 = vmatpush1.msra.mxu0 0.0
        %446 = vmatprep.subr.mxu0 0.0
        %447 = vmatpush1.msra.mxu0 0.0
        %448 = vmatprep.mubr.f32.mxu0 0.0
        %449 = vmatmul.mubr.f32.gmra.mrb[0].mxu0 %v372
        %v450 = vpop.f32.mrb[0].mxu0
        %v451 = vadd.f32 %v383, %v450
        %v452 = vpop.f32.mrb[0].mxu0
        %453 = vmatprep.mubr.f32.mxu0 0.0
        %454 = vmatmul.mubr.f32.gmra.mrb[0].mxu0 %v373
        %v455 = vpop.f32.mrb[0].mxu0
        %v456 = vadd.f32 %v383, %v455
        %v457 = vpop.f32.mrb[0].mxu0
        %458 = vmatprep.mubr.f32.mxu0 0.0
        %459 = vmatmul.mubr.f32.gmra.mrb[0].mxu0 %v374
        %v460 = vpop.f32.mrb[0].mxu0
        %v461 = vadd.f32 %v383, %v460
        %v462 = vpop.f32.mrb[0].mxu0
        %463 = vmatprep.mubr.f32.mxu0 0.0
        %464 = vmatmul.mubr.f32.gmra.mrb[0].mxu0 %v375
        %v465 = vpop.f32.mrb[0].mxu0
        %v466 = vadd.f32 %v383, %v465
        %v467 = vpop.f32.mrb[0].mxu0
        %468 = vmatprep.mubr.f32.mxu0 0.0
        %469 = vmatmul.mubr.f32.gmra.mrb[0].mxu0 %v376
        %v470 = vpop.f32.mrb[0].mxu0
        %v471 = vadd.f32 %v383, %v470
        %v472 = vpop.f32.mrb[0].mxu0
        %473 = vmatprep.mubr.f32.mxu0 0.0
        %474 = vmatmul.mubr.f32.gmra.mrb[0].mxu0 %v377
        %v475 = vpop.f32.mrb[0].mxu0
        %v476 = vadd.f32 %v383, %v475
        %v477 = vpop.f32.mrb[0].mxu0
        %478 = vmatprep.mubr.f32.mxu0 0.0
        %479 = vmatmul.mubr.f32.gmra.mrb[0].mxu0 %v378
        %v480 = vpop.f32.mrb[0].mxu0
        %v481 = vadd.f32 %v383, %v480
        %v482 = vpop.f32.mrb[0].mxu0
        %483 = vmatprep.mubr.f32.mxu0 0.0
        %484 = vmatmul.mubr.f32.gmra.mrb[0].mxu0 %v379
        %v485 = vpop.f32.mrb[0].mxu0
        %v486 = vadd.f32 %v383, %v485
        %v487 = vpop.f32.mrb[0].mxu0
        %488 = vdwg.mxu0
        %v489 = vmax.f32 %v451, 0.0
        %v490 = vmax.f32 %v456, 0.0
        %v491 = vmax.f32 %v461, 0.0
        %v492 = vmax.f32 %v466, 0.0
        %v493 = vmax.f32 %v471, 0.0
        %v494 = vmax.f32 %v476, 0.0
        %v495 = vmax.f32 %v481, 0.0
        %v496 = vmax.f32 %v486, 0.0
        %v497 = vlaneseq
        %v498 = vshrl.u32 %v497, 7
        %v499 = vsub.s32 0, %v498
        %v500 = vrot.slane %v362, %v499
        %501 = vmatprep.subr.mxu0 0.0
        %502 = vmatpush1.msra.mxu0 %v277
        %503 = vmatprep.subr.mxu0 0.0
        %504 = vmatpush1.msra.mxu0 %v278
        %505 = vmatprep.subr.mxu0 0.0
        %506 = vmatpush1.msra.mxu0 %v279
        %507 = vmatprep.subr.mxu0 0.0
        %508 = vmatpush1.msra.mxu0 %v280
        %509 = vmatprep.subr.mxu0 0.0
        %510 = vmatpush1.msra.mxu0 %v281
        %511 = vmatprep.subr.mxu0 0.0
        %512 = vmatpush1.msra.mxu0 %v282
        %513 = vmatprep.subr.mxu0 0.0
        %514 = vmatpush1.msra.mxu0 %v283
        %515 = vmatprep.subr.mxu0 0.0
        %516 = vmatpush1.msra.mxu0 %v284
        %517 = vmatprep.subr.mxu0 0.0
        %518 = vmatpush1.msra.mxu0 %v285
        %519 = vmatprep.subr.mxu0 0.0
        %520 = vmatpush1.msra.mxu0 %v286
        %521 = vmatprep.subr.mxu0 0.0
        %522 = vmatpush1.msra.mxu0 %v287
        %523 = vmatprep.subr.mxu0 0.0
        %524 = vmatpush1.msra.mxu0 %v288
        %525 = vmatprep.subr.mxu0 0.0
        %526 = vmatpush1.msra.mxu0 %v289
        %527 = vmatprep.subr.mxu0 0.0
        %528 = vmatpush1.msra.mxu0 %v290
        %529 = vmatprep.subr.mxu0 0.0
        %530 = vmatpush1.msra.mxu0 %v291
        %531 = vmatprep.subr.mxu0 0.0
        %532 = vmatpush1.msra.mxu0 %v292
        %533 = vmatprep.subr.mxu0 0.0
        %534 = vmatpush1.msra.mxu0 0.0
        %535 = vmatprep.subr.mxu0 0.0
        %536 = vmatpush1.msra.mxu0 0.0
        %537 = vmatprep.subr.mxu0 0.0
        %538 = vmatpush1.msra.mxu0 0.0
        %539 = vmatprep.subr.mxu0 0.0
        %540 = vmatpush1.msra.mxu0 0.0
        %541 = vmatprep.subr.mxu0 0.0
        %542 = vmatpush1.msra.mxu0 0.0
        %543 = vmatprep.subr.mxu0 0.0
        %544 = vmatpush1.msra.mxu0 0.0
        %545 = vmatprep.subr.mxu0 0.0
        %546 = vmatpush1.msra.mxu0 0.0
        %547 = vmatprep.subr.mxu0 0.0
        %548 = vmatpush1.msra.mxu0 0.0
        %549 = vmatprep.subr.mxu0 0.0
        %550 = vmatpush1.msra.mxu0 0.0
        %551 = vmatprep.subr.mxu0 0.0
        %552 = vmatpush1.msra.mxu0 0.0
        %553 = vmatprep.subr.mxu0 0.0
        %554 = vmatpush1.msra.mxu0 0.0
        %555 = vmatprep.subr.mxu0 0.0
        %556 = vmatpush1.msra.mxu0 0.0
        %557 = vmatprep.subr.mxu0 0.0
        %558 = vmatpush1.msra.mxu0 0.0
        %559 = vmatprep.subr.mxu0 0.0
        %560 = vmatpush1.msra.mxu0 0.0
        %561 = vmatprep.subr.mxu0 0.0
        %562 = vmatpush1.msra.mxu0 0.0
        %563 = vmatprep.subr.mxu0 0.0
        %564 = vmatpush1.msra.mxu0 0.0
        %565 = vmatprep.mubr.f32.mxu0 0.0
        %566 = vmatmul.mubr.f32.gmra.mrb[0].mxu0 %v489
        %v567 = vpop.f32.mrb[0].mxu0
        %v568 = vadd.f32 %v500, %v567
        %v569 = vpop.f32.mrb[0].mxu0
        %570 = vmatprep.mubr.f32.mxu0 0.0
        %571 = vmatmul.mubr.f32.gmra.mrb[0].mxu0 %v490
        %v572 = vpop.f32.mrb[0].mxu0
        %v573 = vadd.f32 %v500, %v572
        %v574 = vpop.f32.mrb[0].mxu0
        %575 = vmatprep.mubr.f32.mxu0 0.0
        %576 = vmatmul.mubr.f32.gmra.mrb[0].mxu0 %v491
        %v577 = vpop.f32.mrb[0].mxu0
        %v578 = vadd.f32 %v500, %v577
        %v579 = vpop.f32.mrb[0].mxu0
        %580 = vmatprep.mubr.f32.mxu0 0.0
        %581 = vmatmul.mubr.f32.gmra.mrb[0].mxu0 %v492
        %v582 = vpop.f32.mrb[0].mxu0
        %v583 = vadd.f32 %v500, %v582
        %v584 = vpop.f32.mrb[0].mxu0
        %585 = vmatprep.mubr.f32.mxu0 0.0
        %586 = vmatmul.mubr.f32.gmra.mrb[0].mxu0 %v493
        %v587 = vpop.f32.mrb[0].mxu0
        %v588 = vadd.f32 %v500, %v587
        %v589 = vpop.f32.mrb[0].mxu0
        %590 = vmatprep.mubr.f32.mxu0 0.0
        %591 = vmatmul.mubr.f32.gmra.mrb[0].mxu0 %v494
        %v592 = vpop.f32.mrb[0].mxu0
        %v593 = vadd.f32 %v500, %v592
        %v594 = vpop.f32.mrb[0].mxu0
        %595 = vmatprep.mubr.f32.mxu0 0.0
        %596 = vmatmul.mubr.f32.gmra.mrb[0].mxu0 %v495
        %v597 = vpop.f32.mrb[0].mxu0
        %v598 = vadd.f32 %v500, %v597
        %v599 = vpop.f32.mrb[0].mxu0
        %600 = vmatprep.mubr.f32.mxu0 0.0
        %601 = vmatmul.mubr.f32.gmra.mrb[0].mxu0 %v496
        %v602 = vpop.f32.mrb[0].mxu0
        %v603 = vadd.f32 %v500, %v602
        %v604 = vpop.f32.mrb[0].mxu0
        %605 = vdwg.mxu0
        %606 = vmatprep.subr.mxu0 0.0
        %607 = vmatpush1.msra.mxu0 %v294
        %608 = vmatprep.subr.mxu0 0.0
        %609 = vmatpush1.msra.mxu0 %v295
        %610 = vmatprep.subr.mxu0 0.0
        %611 = vmatpush1.msra.mxu0 %v296
        %612 = vmatprep.subr.mxu0 0.0
        %613 = vmatpush1.msra.mxu0 %v297
        %614 = vmatprep.subr.mxu0 0.0
        %615 = vmatpush1.msra.mxu0 %v298
        %616 = vmatprep.subr.mxu0 0.0
        %617 = vmatpush1.msra.mxu0 %v299
        %618 = vmatprep.subr.mxu0 0.0
        %619 = vmatpush1.msra.mxu0 %v300
        %620 = vmatprep.subr.mxu0 0.0
        %621 = vmatpush1.msra.mxu0 %v301
        %622 = vmatprep.subr.mxu0 0.0
        %623 = vmatpush1.msra.mxu0 %v302
        %624 = vmatprep.subr.mxu0 0.0
        %625 = vmatpush1.msra.mxu0 %v303
        %626 = vmatprep.subr.mxu0 0.0
        %627 = vmatpush1.msra.mxu0 %v304
        %628 = vmatprep.subr.mxu0 0.0
        %629 = vmatpush1.msra.mxu0 %v305
        %630 = vmatprep.subr.mxu0 0.0
        %631 = vmatpush1.msra.mxu0 %v306
        %632 = vmatprep.subr.mxu0 0.0
        %633 = vmatpush1.msra.mxu0 %v307
        %634 = vmatprep.subr.mxu0 0.0
        %635 = vmatpush1.msra.mxu0 %v308
        %636 = vmatprep.subr.mxu0 0.0
        %637 = vmatpush1.msra.mxu0 %v309
        %638 = vmatprep.subr.mxu0 0.0
        %639 = vmatpush1.msra.mxu0 0.0
        %640 = vmatprep.subr.mxu0 0.0
        %641 = vmatpush1.msra.mxu0 0.0
        %642 = vmatprep.subr.mxu0 0.0
        %643 = vmatpush1.msra.mxu0 0.0
        %644 = vmatprep.subr.mxu0 0.0
        %645 = vmatpush1.msra.mxu0 0.0
        %646 = vmatprep.subr.mxu0 0.0
        %647 = vmatpush1.msra.mxu0 0.0
        %648 = vmatprep.subr.mxu0 0.0
        %649 = vmatpush1.msra.mxu0 0.0
        %650 = vmatprep.subr.mxu0 0.0
        %651 = vmatpush1.msra.mxu0 0.0
        %652 = vmatprep.subr.mxu0 0.0
        %653 = vmatpush1.msra.mxu0 0.0
        %654 = vmatprep.subr.mxu0 0.0
        %655 = vmatpush1.msra.mxu0 0.0
        %656 = vmatprep.subr.mxu0 0.0
        %657 = vmatpush1.msra.mxu0 0.0
        %658 = vmatprep.subr.mxu0 0.0
        %659 = vmatpush1.msra.mxu0 0.0
        %660 = vmatprep.subr.mxu0 0.0
        %661 = vmatpush1.msra.mxu0 0.0
        %662 = vmatprep.subr.mxu0 0.0
        %663 = vmatpush1.msra.mxu0 0.0
        %664 = vmatprep.subr.mxu0 0.0
        %665 = vmatpush1.msra.mxu0 0.0
        %666 = vmatprep.subr.mxu0 0.0
        %667 = vmatpush1.msra.mxu0 0.0
        %668 = vmatprep.subr.mxu0 0.0
        %669 = vmatpush1.msra.mxu0 0.0
        %670 = vmatprep.mubr.f32.mxu0 0.0
        %671 = vmatmul.mubr.f32.gmra.mrb[0].mxu0 %v568
        %v672 = vpop.f32.mrb[0].mxu0
        %v673 = vadd.f32 0.0, %v672
        %v674 = vpop.f32.mrb[0].mxu0
        %675 = vmatprep.mubr.f32.mxu0 0.0
        %676 = vmatmul.mubr.f32.gmra.mrb[0].mxu0 %v573
        %v677 = vpop.f32.mrb[0].mxu0
        %v678 = vadd.f32 0.0, %v677
        %v679 = vpop.f32.mrb[0].mxu0
        %680 = vmatprep.mubr.f32.mxu0 0.0
        %681 = vmatmul.mubr.f32.gmra.mrb[0].mxu0 %v578
        %v682 = vpop.f32.mrb[0].mxu0
        %v683 = vadd.f32 0.0, %v682
        %v684 = vpop.f32.mrb[0].mxu0
        %685 = vmatprep.mubr.f32.mxu0 0.0
        %686 = vmatmul.mubr.f32.gmra.mrb[0].mxu0 %v583
        %v687 = vpop.f32.mrb[0].mxu0
        %v688 = vadd.f32 0.0, %v687
        %v689 = vpop.f32.mrb[0].mxu0
        %690 = vmatprep.mubr.f32.mxu0 0.0
        %691 = vmatmul.mubr.f32.gmra.mrb[0].mxu0 %v588
        %v692 = vpop.f32.mrb[0].mxu0
        %v693 = vadd.f32 0.0, %v692
        %v694 = vpop.f32.mrb[0].mxu0
        %695 = vmatprep.mubr.f32.mxu0 0.0
        %696 = vmatmul.mubr.f32.gmra.mrb[0].mxu0 %v593
        %v697 = vpop.f32.mrb[0].mxu0
        %v698 = vadd.f32 0.0, %v697
        %v699 = vpop.f32.mrb[0].mxu0
        %700 = vmatprep.mubr.f32.mxu0 0.0
        %701 = vmatmul.mubr.f32.gmra.mrb[0].mxu0 %v598
        %v702 = vpop.f32.mrb[0].mxu0
        %v703 = vadd.f32 0.0, %v702
        %v704 = vpop.f32.mrb[0].mxu0
        %705 = vmatprep.mubr.f32.mxu0 0.0
        %706 = vmatmul.mubr.f32.gmra.mrb[0].mxu0 %v603
        %v707 = vpop.f32.mrb[0].mxu0
        %v708 = vadd.f32 0.0, %v707
        %v709 = vpop.f32.mrb[0].mxu0
        %710 = vdwg.mxu0
        %v711 = vmul.f32 %v673, 0.03125
        %v712 = vmul.f32 %v678, 0.03125
        %v713 = vmul.f32 %v683, 0.03125
        %v714 = vmul.f32 %v688, 0.03125
        %v715 = vmul.f32 %v693, 0.03125
        %v716 = vmul.f32 %v698, 0.03125
        %v717 = vmul.f32 %v703, 0.03125
        %v718 = vmul.f32 %v708, 0.03125
        %v719 = vsub.f32 %v568, %v711
        %v720 = vsub.f32 %v573, %v712
        %v721 = vsub.f32 %v578, %v713
        %v722 = vsub.f32 %v583, %v714
        %v723 = vsub.f32 %v588, %v715
        %v724 = vsub.f32 %v593, %v716
        %v725 = vsub.f32 %v598, %v717
        %v726 = vsub.f32 %v603, %v718
        %v727 = vmul.f32 %v719, %v719
        %v728 = vmul.f32 %v720, %v720
        %v729 = vmul.f32 %v721, %v721
        %v730 = vmul.f32 %v722, %v722
        %v731 = vmul.f32 %v723, %v723
        %v732 = vmul.f32 %v724, %v724
        %v733 = vmul.f32 %v725, %v725
        %v734 = vmul.f32 %v726, %v726
        %735 = vmatprep.subr.mxu0 0.0
        %736 = vmatpush1.msra.mxu0 %v294
        %737 = vmatprep.subr.mxu0 0.0
        %738 = vmatpush1.msra.mxu0 %v295
        %739 = vmatprep.subr.mxu0 0.0
        %740 = vmatpush1.msra.mxu0 %v296
        %741 = vmatprep.subr.mxu0 0.0
        %742 = vmatpush1.msra.mxu0 %v297
        %743 = vmatprep.subr.mxu0 0.0
        %744 = vmatpush1.msra.mxu0 %v298
        %745 = vmatprep.subr.mxu0 0.0
        %746 = vmatpush1.msra.mxu0 %v299
        %747 = vmatprep.subr.mxu0 0.0
        %748 = vmatpush1.msra.mxu0 %v300
        %749 = vmatprep.subr.mxu0 0.0
        %750 = vmatpush1.msra.mxu0 %v301
        %751 = vmatprep.subr.mxu0 0.0
        %752 = vmatpush1.msra.mxu0 %v302
        %753 = vmatprep.subr.mxu0 0.0
        %754 = vmatpush1.msra.mxu0 %v303
        %755 = vmatprep.subr.mxu0 0.0
        %756 = vmatpush1.msra.mxu0 %v304
        %757 = vmatprep.subr.mxu0 0.0
        %758 = vmatpush1.msra.mxu0 %v305
        %759 = vmatprep.subr.mxu0 0.0
        %760 = vmatpush1.msra.mxu0 %v306
        %761 = vmatprep.subr.mxu0 0.0
        %762 = vmatpush1.msra.mxu0 %v307
        %763 = vmatprep.subr.mxu0 0.0
        %764 = vmatpush1.msra.mxu0 %v308
        %765 = vmatprep.subr.mxu0 0.0
        %766 = vmatpush1.msra.mxu0 %v309
        %767 = vmatprep.subr.mxu0 0.0
        %768 = vmatpush1.msra.mxu0 0.0
        %769 = vmatprep.subr.mxu0 0.0
        %770 = vmatpush1.msra.mxu0 0.0
        %771 = vmatprep.subr.mxu0 0.0
        %772 = vmatpush1.msra.mxu0 0.0
        %773 = vmatprep.subr.mxu0 0.0
        %774 = vmatpush1.msra.mxu0 0.0
        %775 = vmatprep.subr.mxu0 0.0
        %776 = vmatpush1.msra.mxu0 0.0
        %777 = vmatprep.subr.mxu0 0.0
        %778 = vmatpush1.msra.mxu0 0.0
        %779 = vmatprep.subr.mxu0 0.0
        %780 = vmatpush1.msra.mxu0 0.0
        %781 = vmatprep.subr.mxu0 0.0
        %782 = vmatpush1.msra.mxu0 0.0
        %783 = vmatprep.subr.mxu0 0.0
        %784 = vmatpush1.msra.mxu0 0.0
        %785 = vmatprep.subr.mxu0 0.0
        %786 = vmatpush1.msra.mxu0 0.0
        %787 = vmatprep.subr.mxu0 0.0
        %788 = vmatpush1.msra.mxu0 0.0
        %789 = vmatprep.subr.mxu0 0.0
        %790 = vmatpush1.msra.mxu0 0.0
        %791 = vmatprep.subr.mxu0 0.0
        %792 = vmatpush1.msra.mxu0 0.0
        %793 = vmatprep.subr.mxu0 0.0
        %794 = vmatpush1.msra.mxu0 0.0
        %795 = vmatprep.subr.mxu0 0.0
        %796 = vmatpush1.msra.mxu0 0.0
        %797 = vmatprep.subr.mxu0 0.0
        %798 = vmatpush1.msra.mxu0 0.0
        %799 = vmatprep.mubr.f32.mxu0 0.0
        %800 = vmatmul.mubr.f32.gmra.mrb[0].mxu0 %v727
        %v801 = vpop.f32.mrb[0].mxu0
        %v802 = vadd.f32 0.0, %v801
        %v803 = vpop.f32.mrb[0].mxu0
        %804 = vmatprep.mubr.f32.mxu0 0.0
        %805 = vmatmul.mubr.f32.gmra.mrb[0].mxu0 %v728
        %v806 = vpop.f32.mrb[0].mxu0
        %v807 = vadd.f32 0.0, %v806
        %v808 = vpop.f32.mrb[0].mxu0
        %809 = vmatprep.mubr.f32.mxu0 0.0
        %810 = vmatmul.mubr.f32.gmra.mrb[0].mxu0 %v729
        %v811 = vpop.f32.mrb[0].mxu0
        %v812 = vadd.f32 0.0, %v811
        %v813 = vpop.f32.mrb[0].mxu0
        %814 = vmatprep.mubr.f32.mxu0 0.0
        %815 = vmatmul.mubr.f32.gmra.mrb[0].mxu0 %v730
        %v816 = vpop.f32.mrb[0].mxu0
        %v817 = vadd.f32 0.0, %v816
        %v818 = vpop.f32.mrb[0].mxu0
        %819 = vmatprep.mubr.f32.mxu0 0.0
        %820 = vmatmul.mubr.f32.gmra.mrb[0].mxu0 %v731
        %v821 = vpop.f32.mrb[0].mxu0
        %v822 = vadd.f32 0.0, %v821
        %v823 = vpop.f32.mrb[0].mxu0
        %824 = vmatprep.mubr.f32.mxu0 0.0
        %825 = vmatmul.mubr.f32.gmra.mrb[0].mxu0 %v732
        %v826 = vpop.f32.mrb[0].mxu0
        %v827 = vadd.f32 0.0, %v826
        %v828 = vpop.f32.mrb[0].mxu0
        %829 = vmatprep.mubr.f32.mxu0 0.0
        %830 = vmatmul.mubr.f32.gmra.mrb[0].mxu0 %v733
        %v831 = vpop.f32.mrb[0].mxu0
        %v832 = vadd.f32 0.0, %v831
        %v833 = vpop.f32.mrb[0].mxu0
        %834 = vmatprep.mubr.f32.mxu0 0.0
        %835 = vmatmul.mubr.f32.gmra.mrb[0].mxu0 %v734
        %v836 = vpop.f32.mrb[0].mxu0
        %v837 = vadd.f32 0.0, %v836
        %v838 = vpop.f32.mrb[0].mxu0
        %839 = vdwg.mxu0
        %v840 = vmul.f32 %v802, 0.03125
        %v841 = vmul.f32 %v807, 0.03125
        %v842 = vmul.f32 %v812, 0.03125
        %v843 = vmul.f32 %v817, 0.03125
        %v844 = vmul.f32 %v822, 0.03125
        %v845 = vmul.f32 %v827, 0.03125
        %v846 = vmul.f32 %v832, 0.03125
        %v847 = vmul.f32 %v837, 0.03125
        %v848 = vadd.f32 %v840, 1e-12
        %v849 = vadd.f32 %v841, 1e-12
        %v850 = vadd.f32 %v842, 1e-12
        %v851 = vadd.f32 %v843, 1e-12
        %v852 = vadd.f32 %v844, 1e-12
        %v853 = vadd.f32 %v845, 1e-12
        %v854 = vadd.f32 %v846, 1e-12
        %v855 = vadd.f32 %v847, 1e-12
        %v856 = vrsqrt.pop %v848
        %v857 = vrsqrt.pop %v849
        %v858 = vrsqrt.pop %v850
        %v859 = vrsqrt.pop %v851
        %v860 = vrsqrt.pop %v852
        %v861 = vrsqrt.pop %v853
        %v862 = vrsqrt.pop %v854
        %v863 = vrsqrt.pop %v855
        %v864 = vmul.f32 %v719, %v856
        %v865 = vmul.f32 %v720, %v857
        %v866 = vmul.f32 %v721, %v858
        %v867 = vmul.f32 %v722, %v859
        %v868 = vmul.f32 %v723, %v860
        %v869 = vmul.f32 %v724, %v861
        %v870 = vmul.f32 %v725, %v862
        %v871 = vmul.f32 %v726, %v863
        %v872 = vlaneseq
        %v873 = vshrl.u32 %v872, 7
        %v874 = vsub.s32 0, %v873
        %v875 = vrot.slane %v363, %v874
        %v876 = vmul.f32 %v864, %v875
        %v877 = vmul.f32 %v865, %v875
        %v878 = vmul.f32 %v866, %v875
        %v879 = vmul.f32 %v867, %v875
        %v880 = vmul.f32 %v868, %v875
        %v881 = vmul.f32 %v869, %v875
        %v882 = vmul.f32 %v870, %v875
        %v883 = vmul.f32 %v871, %v875
        %v884 = vlaneseq
        %v885 = vshrl.u32 %v884, 7
        %v886 = vsub.s32 0, %v885
        %v887 = vrot.slane %v364, %v886
        %v888 = vadd.f32 %v876, %v887
        %v889 = vadd.f32 %v877, %v887
        %v890 = vadd.f32 %v878, %v887
        %v891 = vadd.f32 %v879, %v887
        %v892 = vadd.f32 %v880, %v887
        %v893 = vadd.f32 %v881, %v887
        %v894 = vadd.f32 %v882, %v887
        %v895 = vadd.f32 %v883, %v887
        %v896 = vlaneseq
        %v897 = vshrl.u32 %v896, 7
        %v898 = vsub.s32 0, %v897
        %v899 = vrot.slane %v365, %v898
        %v900 = vmul.f32 %v888, %v899
        %v901 = vmul.f32 %v889, %v899
        %v902 = vmul.f32 %v890, %v899
        %v903 = vmul.f32 %v891, %v899
        %v904 = vmul.f32 %v892, %v899
        %v905 = vmul.f32 %v893, %v899
        %v906 = vmul.f32 %v894, %v899
        %v907 = vmul.f32 %v895, %v899
        %908 = vmatprep.subr.mxu0 0.0
        %909 = vmatpush1.msra.mxu0 %v294
        %910 = vmatprep.subr.mxu0 0.0
        %911 = vmatpush1.msra.mxu0 %v295
        %912 = vmatprep.subr.mxu0 0.0
        %913 = vmatpush1.msra.mxu0 %v296
        %914 = vmatprep.subr.mxu0 0.0
        %915 = vmatpush1.msra.mxu0 %v297
        %916 = vmatprep.subr.mxu0 0.0
        %917 = vmatpush1.msra.mxu0 %v298
        %918 = vmatprep.subr.mxu0 0.0
        %919 = vmatpush1.msra.mxu0 %v299
        %920 = vmatprep.subr.mxu0 0.0
        %921 = vmatpush1.msra.mxu0 %v300
        %922 = vmatprep.subr.mxu0 0.0
        %923 = vmatpush1.msra.mxu0 %v301
        %924 = vmatprep.subr.mxu0 0.0
        %925 = vmatpush1.msra.mxu0 %v302
        %926 = vmatprep.subr.mxu0 0.0
        %927 = vmatpush1.msra.mxu0 %v303
        %928 = vmatprep.subr.mxu0 0.0
        %929 = vmatpush1.msra.mxu0 %v304
        %930 = vmatprep.subr.mxu0 0.0
        %931 = vmatpush1.msra.mxu0 %v305
        %932 = vmatprep.subr.mxu0 0.0
        %933 = vmatpush1.msra.mxu0 %v306
        %934 = vmatprep.subr.mxu0 0.0
        %935 = vmatpush1.msra.mxu0 %v307
        %936 = vmatprep.subr.mxu0 0.0
        %937 = vmatpush1.msra.mxu0 %v308
        %938 = vmatprep.subr.mxu0 0.0
        %939 = vmatpush1.msra.mxu0 %v309
        %940 = vmatprep.subr.mxu0 0.0
        %941 = vmatpush1.msra.mxu0 0.0
        %942 = vmatprep.subr.mxu0 0.0
        %943 = vmatpush1.msra.mxu0 0.0
        %944 = vmatprep.subr.mxu0 0.0
        %945 = vmatpush1.msra.mxu0 0.0
        %946 = vmatprep.subr.mxu0 0.0
        %947 = vmatpush1.msra.mxu0 0.0
        %948 = vmatprep.subr.mxu0 0.0
        %949 = vmatpush1.msra.mxu0 0.0
        %950 = vmatprep.subr.mxu0 0.0
        %951 = vmatpush1.msra.mxu0 0.0
        %952 = vmatprep.subr.mxu0 0.0
        %953 = vmatpush1.msra.mxu0 0.0
        %954 = vmatprep.subr.mxu0 0.0
        %955 = vmatpush1.msra.mxu0 0.0
        %956 = vmatprep.subr.mxu0 0.0
        %957 = vmatpush1.msra.mxu0 0.0
        %958 = vmatprep.subr.mxu0 0.0
        %959 = vmatpush1.msra.mxu0 0.0
        %960 = vmatprep.subr.mxu0 0.0
        %961 = vmatpush1.msra.mxu0 0.0
        %962 = vmatprep.subr.mxu0 0.0
        %963 = vmatpush1.msra.mxu0 0.0
        %964 = vmatprep.subr.mxu0 0.0
        %965 = vmatpush1.msra.mxu0 0.0
        %966 = vmatprep.subr.mxu0 0.0
        %967 = vmatpush1.msra.mxu0 0.0
        %968 = vmatprep.subr.mxu0 0.0
        %969 = vmatpush1.msra.mxu0 0.0
        %970 = vmatprep.subr.mxu0 0.0
        %971 = vmatpush1.msra.mxu0 0.0
        %972 = vmatprep.mubr.f32.mxu0 0.0
        %973 = vmatmul.mubr.f32.gmra.mrb[0].mxu0 %v900
        %v974 = vpop.f32.mrb[0].mxu0
        %v975 = vadd.f32 0.0, %v974
        %v976 = vpop.f32.mrb[0].mxu0
        %977 = vmatprep.mubr.f32.mxu0 0.0
        %978 = vmatmul.mubr.f32.gmra.mrb[0].mxu0 %v901
        %v979 = vpop.f32.mrb[0].mxu0
        %v980 = vadd.f32 0.0, %v979
        %v981 = vpop.f32.mrb[0].mxu0
        %982 = vmatprep.mubr.f32.mxu0 0.0
        %983 = vmatmul.mubr.f32.gmra.mrb[0].mxu0 %v902
        %v984 = vpop.f32.mrb[0].mxu0
        %v985 = vadd.f32 0.0, %v984
        %v986 = vpop.f32.mrb[0].mxu0
        %987 = vmatprep.mubr.f32.mxu0 0.0
        %988 = vmatmul.mubr.f32.gmra.mrb[0].mxu0 %v903
        %v989 = vpop.f32.mrb[0].mxu0
        %v990 = vadd.f32 0.0, %v989
        %v991 = vpop.f32.mrb[0].mxu0
        %992 = vmatprep.mubr.f32.mxu0 0.0
        %993 = vmatmul.mubr.f32.gmra.mrb[0].mxu0 %v904
        %v994 = vpop.f32.mrb[0].mxu0
        %v995 = vadd.f32 0.0, %v994
        %v996 = vpop.f32.mrb[0].mxu0
        %997 = vmatprep.mubr.f32.mxu0 0.0
        %998 = vmatmul.mubr.f32.gmra.mrb[0].mxu0 %v905
        %v999 = vpop.f32.mrb[0].mxu0
        %v1000 = vadd.f32 0.0, %v999
        %v1001 = vpop.f32.mrb[0].mxu0
        %1002 = vmatprep.mubr.f32.mxu0 0.0
        %1003 = vmatmul.mubr.f32.gmra.mrb[0].mxu0 %v906
        %v1004 = vpop.f32.mrb[0].mxu0
        %v1005 = vadd.f32 0.0, %v1004
        %v1006 = vpop.f32.mrb[0].mxu0
        %1007 = vmatprep.mubr.f32.mxu0 0.0
        %1008 = vmatmul.mubr.f32.gmra.mrb[0].mxu0 %v907
        %v1009 = vpop.f32.mrb[0].mxu0
        %v1010 = vadd.f32 0.0, %v1009
        %v1011 = vpop.f32.mrb[0].mxu0
        %1012 = vdwg.mxu0
        %v1013 = vtanh.pop %v975
        %v1014 = vtanh.pop %v980
        %v1015 = vtanh.pop %v985
        %v1016 = vtanh.pop %v990
        %v1017 = vtanh.pop %v995
        %v1018 = vtanh.pop %v1000
        %v1019 = vtanh.pop %v1005
        %v1020 = vtanh.pop %v1010
        %v1021 = vrot.slane %v1013, 4
        %v1022 = vmax.f32 %v1013, %v1021
        %v1023 = vrot.slane %v1022, 2
        %v1024 = vmax.f32 %v1022, %v1023
        %v1025 = vrot.slane %v1024, 1
        %v1026 = vmax.f32 %v1024, %v1025
        %v1027 = vrot.slane %v1014, 4
        %v1028 = vmax.f32 %v1014, %v1027
        %v1029 = vrot.slane %v1028, 2
        %v1030 = vmax.f32 %v1028, %v1029
        %v1031 = vrot.slane %v1030, 1
        %v1032 = vmax.f32 %v1030, %v1031
        %v1033 = vrot.slane %v1015, 4
        %v1034 = vmax.f32 %v1015, %v1033
        %v1035 = vrot.slane %v1034, 2
        %v1036 = vmax.f32 %v1034, %v1035
        %v1037 = vrot.slane %v1036, 1
        %v1038 = vmax.f32 %v1036, %v1037
        %v1039 = vrot.slane %v1016, 4
        %v1040 = vmax.f32 %v1016, %v1039
        %v1041 = vrot.slane %v1040, 2
        %v1042 = vmax.f32 %v1040, %v1041
        %v1043 = vrot.slane %v1042, 1
        %v1044 = vmax.f32 %v1042, %v1043
        %v1045 = vrot.slane %v1017, 4
        %v1046 = vmax.f32 %v1017, %v1045
        %v1047 = vrot.slane %v1046, 2
        %v1048 = vmax.f32 %v1046, %v1047
        %v1049 = vrot.slane %v1048, 1
        %v1050 = vmax.f32 %v1048, %v1049
        %v1051 = vrot.slane %v1018, 4
        %v1052 = vmax.f32 %v1018, %v1051
        %v1053 = vrot.slane %v1052, 2
        %v1054 = vmax.f32 %v1052, %v1053
        %v1055 = vrot.slane %v1054, 1
        %v1056 = vmax.f32 %v1054, %v1055
        %v1057 = vrot.slane %v1019, 4
        %v1058 = vmax.f32 %v1019, %v1057
        %v1059 = vrot.slane %v1058, 2
        %v1060 = vmax.f32 %v1058, %v1059
        %v1061 = vrot.slane %v1060, 1
        %v1062 = vmax.f32 %v1060, %v1061
        %v1063 = vrot.slane %v1020, 4
        %v1064 = vmax.f32 %v1020, %v1063
        %v1065 = vrot.slane %v1064, 2
        %v1066 = vmax.f32 %v1064, %v1065
        %v1067 = vrot.slane %v1066, 1
        %v1068 = vmax.f32 %v1066, %v1067
        %v1069 = vsub.f32 %v1013, %v1026
        %v1070 = vsub.f32 %v1014, %v1032
        %v1071 = vsub.f32 %v1015, %v1038
        %v1072 = vsub.f32 %v1016, %v1044
        %v1073 = vsub.f32 %v1017, %v1050
        %v1074 = vsub.f32 %v1018, %v1056
        %v1075 = vsub.f32 %v1019, %v1062
        %v1076 = vsub.f32 %v1020, %v1068
        %v1077 = vmul.f32 %v1069, 1.442695
        %v1078 = vpow.pop %v1077
        %v1079 = vmul.f32 %v1070, 1.442695
        %v1080 = vpow.pop %v1079
        %v1081 = vmul.f32 %v1071, 1.442695
        %v1082 = vpow.pop %v1081
        %v1083 = vmul.f32 %v1072, 1.442695
        %v1084 = vpow.pop %v1083
        %v1085 = vmul.f32 %v1073, 1.442695
        %v1086 = vpow.pop %v1085
        %v1087 = vmul.f32 %v1074, 1.442695
        %v1088 = vpow.pop %v1087
        %v1089 = vmul.f32 %v1075, 1.442695
        %v1090 = vpow.pop %v1089
        %v1091 = vmul.f32 %v1076, 1.442695
        %v1092 = vpow.pop %v1091
        %v1093 = vrot.slane %v1078, 4
        %v1094 = vadd.f32 %v1078, %v1093
        %v1095 = vrot.slane %v1094, 2
        %v1096 = vadd.f32 %v1094, %v1095
        %v1097 = vrot.slane %v1096, 1
        %v1098 = vadd.f32 %v1096, %v1097
        %v1099 = vrot.slane %v1080, 4
        %v1100 = vadd.f32 %v1080, %v1099
        %v1101 = vrot.slane %v1100, 2
        %v1102 = vadd.f32 %v1100, %v1101
        %v1103 = vrot.slane %v1102, 1
        %v1104 = vadd.f32 %v1102, %v1103
        %v1105 = vrot.slane %v1082, 4
        %v1106 = vadd.f32 %v1082, %v1105
        %v1107 = vrot.slane %v1106, 2
        %v1108 = vadd.f32 %v1106, %v1107
        %v1109 = vrot.slane %v1108, 1
        %v1110 = vadd.f32 %v1108, %v1109
        %v1111 = vrot.slane %v1084, 4
        %v1112 = vadd.f32 %v1084, %v1111
        %v1113 = vrot.slane %v1112, 2
        %v1114 = vadd.f32 %v1112, %v1113
        %v1115 = vrot.slane %v1114, 1
        %v1116 = vadd.f32 %v1114, %v1115
        %v1117 = vrot.slane %v1086, 4
        %v1118 = vadd.f32 %v1086, %v1117
        %v1119 = vrot.slane %v1118, 2
        %v1120 = vadd.f32 %v1118, %v1119
        %v1121 = vrot.slane %v1120, 1
        %v1122 = vadd.f32 %v1120, %v1121
        %v1123 = vrot.slane %v1088, 4
        %v1124 = vadd.f32 %v1088, %v1123
        %v1125 = vrot.slane %v1124, 2
        %v1126 = vadd.f32 %v1124, %v1125
        %v1127 = vrot.slane %v1126, 1
        %v1128 = vadd.f32 %v1126, %v1127
        %v1129 = vrot.slane %v1090, 4
        %v1130 = vadd.f32 %v1090, %v1129
        %v1131 = vrot.slane %v1130, 2
        %v1132 = vadd.f32 %v1130, %v1131
        %v1133 = vrot.slane %v1132, 1
        %v1134 = vadd.f32 %v1132, %v1133
        %v1135 = vrot.slane %v1092, 4
        %v1136 = vadd.f32 %v1092, %v1135
        %v1137 = vrot.slane %v1136, 2
        %v1138 = vadd.f32 %v1136, %v1137
        %v1139 = vrot.slane %v1138, 1
        %v1140 = vadd.f32 %v1138, %v1139
        %v1141 = vrcp.pop %v1098
        %v1142 = vmul.f32 %v1078, %v1141
        %v1143 = vrcp.pop %v1104
        %v1144 = vmul.f32 %v1080, %v1143
        %v1145 = vrcp.pop %v1110
        %v1146 = vmul.f32 %v1082, %v1145
        %v1147 = vrcp.pop %v1116
        %v1148 = vmul.f32 %v1084, %v1147
        %v1149 = vrcp.pop %v1122
        %v1150 = vmul.f32 %v1086, %v1149
        %v1151 = vrcp.pop %v1128
        %v1152 = vmul.f32 %v1088, %v1151
        %v1153 = vrcp.pop %v1134
        %v1154 = vmul.f32 %v1090, %v1153
        %v1155 = vrcp.pop %v1140
        %v1156 = vmul.f32 %v1092, %v1155
        %v1157 = vmul.f32 %v888, %v1142
        %v1158 = vmul.f32 %v889, %v1144
        %v1159 = vmul.f32 %v890, %v1146
        %v1160 = vmul.f32 %v891, %v1148
        %v1161 = vmul.f32 %v892, %v1150
        %v1162 = vmul.f32 %v893, %v1152
        %v1163 = vmul.f32 %v894, %v1154
        %v1164 = vmul.f32 %v895, %v1156
        %v1165 = vrot.slane %v1157, 4
        %v1166 = vadd.f32 %v1157, %v1165
        %v1167 = vrot.slane %v1166, 2
        %v1168 = vadd.f32 %v1166, %v1167
        %v1169 = vrot.slane %v1168, 1
        %v1170 = vadd.f32 %v1168, %v1169
        %v1171 = vrot.slane %v1158, 4
        %v1172 = vadd.f32 %v1158, %v1171
        %v1173 = vrot.slane %v1172, 2
        %v1174 = vadd.f32 %v1172, %v1173
        %v1175 = vrot.slane %v1174, 1
        %v1176 = vadd.f32 %v1174, %v1175
        %v1177 = vrot.slane %v1159, 4
        %v1178 = vadd.f32 %v1159, %v1177
        %v1179 = vrot.slane %v1178, 2
        %v1180 = vadd.f32 %v1178, %v1179
        %v1181 = vrot.slane %v1180, 1
        %v1182 = vadd.f32 %v1180, %v1181
        %v1183 = vrot.slane %v1160, 4
        %v1184 = vadd.f32 %v1160, %v1183
        %v1185 = vrot.slane %v1184, 2
        %v1186 = vadd.f32 %v1184, %v1185
        %v1187 = vrot.slane %v1186, 1
        %v1188 = vadd.f32 %v1186, %v1187
        %v1189 = vrot.slane %v1161, 4
        %v1190 = vadd.f32 %v1161, %v1189
        %v1191 = vrot.slane %v1190, 2
        %v1192 = vadd.f32 %v1190, %v1191
        %v1193 = vrot.slane %v1192, 1
        %v1194 = vadd.f32 %v1192, %v1193
        %v1195 = vrot.slane %v1162, 4
        %v1196 = vadd.f32 %v1162, %v1195
        %v1197 = vrot.slane %v1196, 2
        %v1198 = vadd.f32 %v1196, %v1197
        %v1199 = vrot.slane %v1198, 1
        %v1200 = vadd.f32 %v1198, %v1199
        %v1201 = vrot.slane %v1163, 4
        %v1202 = vadd.f32 %v1163, %v1201
        %v1203 = vrot.slane %v1202, 2
        %v1204 = vadd.f32 %v1202, %v1203
        %v1205 = vrot.slane %v1204, 1
        %v1206 = vadd.f32 %v1204, %v1205
        %v1207 = vrot.slane %v1164, 4
        %v1208 = vadd.f32 %v1164, %v1207
        %v1209 = vrot.slane %v1208, 2
        %v1210 = vadd.f32 %v1208, %v1209
        %v1211 = vrot.slane %v1210, 1
        %v1212 = vadd.f32 %v1210, %v1211
        %v1213 = vrcp.pop 8.0
        %v1214 = vmul.f32 %v1170, %v1213
        %v1215 = vmul.f32 %v1176, %v1213
        %v1216 = vmul.f32 %v1182, %v1213
        %v1217 = vmul.f32 %v1188, %v1213
        %v1218 = vmul.f32 %v1194, %v1213
        %v1219 = vmul.f32 %v1200, %v1213
        %v1220 = vmul.f32 %v1206, %v1213
        %v1221 = vmul.f32 %v1212, %v1213
        %v1222 = vsub.f32 %v1157, %v1214
        %v1223 = vsub.f32 %v1158, %v1215
        %v1224 = vsub.f32 %v1159, %v1216
        %v1225 = vsub.f32 %v1160, %v1217
        %v1226 = vsub.f32 %v1161, %v1218
        %v1227 = vsub.f32 %v1162, %v1219
        %v1228 = vsub.f32 %v1163, %v1220
        %v1229 = vsub.f32 %v1164, %v1221
        %v1230 = vmul.f32 %v1222, %v1222
        %v1231 = vmul.f32 %v1223, %v1223
        %v1232 = vmul.f32 %v1224, %v1224
        %v1233 = vmul.f32 %v1225, %v1225
        %v1234 = vmul.f32 %v1226, %v1226
        %v1235 = vmul.f32 %v1227, %v1227
        %v1236 = vmul.f32 %v1228, %v1228
        %v1237 = vmul.f32 %v1229, %v1229
        %v1238 = vrot.slane %v1230, 4
        %v1239 = vadd.f32 %v1230, %v1238
        %v1240 = vrot.slane %v1239, 2
        %v1241 = vadd.f32 %v1239, %v1240
        %v1242 = vrot.slane %v1241, 1
        %v1243 = vadd.f32 %v1241, %v1242
        %v1244 = vrot.slane %v1231, 4
        %v1245 = vadd.f32 %v1231, %v1244
        %v1246 = vrot.slane %v1245, 2
        %v1247 = vadd.f32 %v1245, %v1246
        %v1248 = vrot.slane %v1247, 1
        %v1249 = vadd.f32 %v1247, %v1248
        %v1250 = vrot.slane %v1232, 4
        %v1251 = vadd.f32 %v1232, %v1250
        %v1252 = vrot.slane %v1251, 2
        %v1253 = vadd.f32 %v1251, %v1252
        %v1254 = vrot.slane %v1253, 1
        %v1255 = vadd.f32 %v1253, %v1254
        %v1256 = vrot.slane %v1233, 4
        %v1257 = vadd.f32 %v1233, %v1256
        %v1258 = vrot.slane %v1257, 2
        %v1259 = vadd.f32 %v1257, %v1258
        %v1260 = vrot.slane %v1259, 1
        %v1261 = vadd.f32 %v1259, %v1260
        %v1262 = vrot.slane %v1234, 4
        %v1263 = vadd.f32 %v1234, %v1262
        %v1264 = vrot.slane %v1263, 2
        %v1265 = vadd.f32 %v1263, %v1264
        %v1266 = vrot.slane %v1265, 1
        %v1267 = vadd.f32 %v1265, %v1266
        %v1268 = vrot.slane %v1235, 4
        %v1269 = vadd.f32 %v1235, %v1268
        %v1270 = vrot.slane %v1269, 2
        %v1271 = vadd.f32 %v1269, %v1270
        %v1272 = vrot.slane %v1271, 1
        %v1273 = vadd.f32 %v1271, %v1272
        %v1274 = vrot.slane %v1236, 4
        %v1275 = vadd.f32 %v1236, %v1274
        %v1276 = vrot.slane %v1275, 2
        %v1277 = vadd.f32 %v1275, %v1276
        %v1278 = vrot.slane %v1277, 1
        %v1279 = vadd.f32 %v1277, %v1278
        %v1280 = vrot.slane %v1237, 4
        %v1281 = vadd.f32 %v1237, %v1280
        %v1282 = vrot.slane %v1281, 2
        %v1283 = vadd.f32 %v1281, %v1282
        %v1284 = vrot.slane %v1283, 1
        %v1285 = vadd.f32 %v1283, %v1284
        %v1286 = vrcp.pop 7.0
        %v1287 = vmul.f32 %v1243, %v1286
        %v1288 = vmul.f32 %v1249, %v1286
        %v1289 = vmul.f32 %v1255, %v1286
        %v1290 = vmul.f32 %v1261, %v1286
        %v1291 = vmul.f32 %v1267, %v1286
        %v1292 = vmul.f32 %v1273, %v1286
        %v1293 = vmul.f32 %v1279, %v1286
        %v1294 = vmul.f32 %v1285, %v1286
        %v1295 = vrsqrt.pop %v1287
        %v1296 = vmul.f32 %v1287, %v1295
        %vm1297 = vcmp.eq.f32.partialorder %v1287, inf
        %v1298 = vsel %vm1297, %v1287, %v1296
        %vm1299 = vcmp.eq.f32.partialorder %v1287, 0.0
        %v1300 = vand.u32 %v1287, 2147483648
        %v1301 = vsel %vm1299, %v1300, %v1298
        %v1302 = vrsqrt.pop %v1288
        %v1303 = vmul.f32 %v1288, %v1302
        %vm1304 = vcmp.eq.f32.partialorder %v1288, inf
        %v1305 = vsel %vm1304, %v1288, %v1303
        %vm1306 = vcmp.eq.f32.partialorder %v1288, 0.0
        %v1307 = vand.u32 %v1288, 2147483648
        %v1308 = vsel %vm1306, %v1307, %v1305
        %v1309 = vrsqrt.pop %v1289
        %v1310 = vmul.f32 %v1289, %v1309
        %vm1311 = vcmp.eq.f32.partialorder %v1289, inf
        %v1312 = vsel %vm1311, %v1289, %v1310
        %vm1313 = vcmp.eq.f32.partialorder %v1289, 0.0
        %v1314 = vand.u32 %v1289, 2147483648
        %v1315 = vsel %vm1313, %v1314, %v1312
        %v1316 = vrsqrt.pop %v1290
        %v1317 = vmul.f32 %v1290, %v1316
        %vm1318 = vcmp.eq.f32.partialorder %v1290, inf
        %v1319 = vsel %vm1318, %v1290, %v1317
        %vm1320 = vcmp.eq.f32.partialorder %v1290, 0.0
        %v1321 = vand.u32 %v1290, 2147483648
        %v1322 = vsel %vm1320, %v1321, %v1319
        %v1323 = vrsqrt.pop %v1291
        %v1324 = vmul.f32 %v1291, %v1323
        %vm1325 = vcmp.eq.f32.partialorder %v1291, inf
        %v1326 = vsel %vm1325, %v1291, %v1324
        %vm1327 = vcmp.eq.f32.partialorder %v1291, 0.0
        %v1328 = vand.u32 %v1291, 2147483648
        %v1329 = vsel %vm1327, %v1328, %v1326
        %v1330 = vrsqrt.pop %v1292
        %v1331 = vmul.f32 %v1292, %v1330
        %vm1332 = vcmp.eq.f32.partialorder %v1292, inf
        %v1333 = vsel %vm1332, %v1292, %v1331
        %vm1334 = vcmp.eq.f32.partialorder %v1292, 0.0
        %v1335 = vand.u32 %v1292, 2147483648
        %v1336 = vsel %vm1334, %v1335, %v1333
        %v1337 = vrsqrt.pop %v1293
        %v1338 = vmul.f32 %v1293, %v1337
        %vm1339 = vcmp.eq.f32.partialorder %v1293, inf
        %v1340 = vsel %vm1339, %v1293, %v1338
        %vm1341 = vcmp.eq.f32.partialorder %v1293, 0.0
        %v1342 = vand.u32 %v1293, 2147483648
        %v1343 = vsel %vm1341, %v1342, %v1340
        %v1344 = vrsqrt.pop %v1294
        %v1345 = vmul.f32 %v1294, %v1344
        %vm1346 = vcmp.eq.f32.partialorder %v1294, inf
        %v1347 = vsel %vm1346, %v1294, %v1345
        %vm1348 = vcmp.eq.f32.partialorder %v1294, 0.0
        %v1349 = vand.u32 %v1294, 2147483648
        %v1350 = vsel %vm1348, %v1349, %v1347
        %v1351 = vlaneseq
        %v1352 = vshrl.u32 %v1351, 7
        %v1353 = vsub.s32 0, %v1352
        %v1354 = vrot.slane %v366, %v1353
        %v1355 = vmul.f32 %v1170, %v1354
        %v1356 = vmul.f32 %v1176, %v1354
        %v1357 = vmul.f32 %v1182, %v1354
        %v1358 = vmul.f32 %v1188, %v1354
        %v1359 = vmul.f32 %v1194, %v1354
        %v1360 = vmul.f32 %v1200, %v1354
        %v1361 = vmul.f32 %v1206, %v1354
        %v1362 = vmul.f32 %v1212, %v1354
        %v1363 = vlaneseq
        %v1364 = vshrl.u32 %v1363, 7
        %v1365 = vsub.s32 0, %v1364
        %v1366 = vrot.slane %v367, %v1365
        %v1367 = vmul.f32 %v1301, %v1366
        %v1368 = vmul.f32 %v1308, %v1366
        %v1369 = vmul.f32 %v1315, %v1366
        %v1370 = vmul.f32 %v1322, %v1366
        %v1371 = vmul.f32 %v1329, %v1366
        %v1372 = vmul.f32 %v1336, %v1366
        %v1373 = vmul.f32 %v1343, %v1366
        %v1374 = vmul.f32 %v1350, %v1366
        %v1375 = vadd.f32 %v1355, %v1367
        %v1376 = vadd.f32 %v1356, %v1368
        %v1377 = vadd.f32 %v1357, %v1369
        %v1378 = vadd.f32 %v1358, %v1370
        %v1379 = vadd.f32 %v1359, %v1371
        %v1380 = vadd.f32 %v1360, %v1372
        %v1381 = vadd.f32 %v1361, %v1373
        %v1382 = vadd.f32 %v1362, %v1374
        %v1391 = vrot.slane %v1376, 7
        %vm1392 = vcmask 1041409
        %v1393 = vsel %vm1392, %v1391, %v1375
        %v1394 = vrot.slane %v1377, 6
        %vm1395 = vcmask 1042434
        %v1396 = vsel %vm1395, %v1394, %v1393
        %v1397 = vrot.slane %v1378, 5
        %vm1398 = vcmask 1043459
        %v1399 = vsel %vm1398, %v1397, %v1396
        %v1400 = vrot.slane %v1379, 4
        %vm1401 = vcmask 1044484
        %v1402 = vsel %vm1401, %v1400, %v1399
        %v1403 = vrot.slane %v1380, 3
        %vm1404 = vcmask 1045509
        %v1405 = vsel %vm1404, %v1403, %v1402
        %v1406 = vrot.slane %v1381, 2
        %vm1407 = vcmask 1046534
        %v1408 = vsel %vm1407, %v1406, %v1405
        %v1409 = vrot.slane %v1382, 1
        %vm1410 = vcmask 1047559
        %v1411 = vsel %vm1410, %v1409, %v1408
        %1413 = vmatprep.subr.mxu0 0.0
        %1414 = vmatpush1.msra.mxu0 %v294
        %1415 = vmatprep.subr.mxu0 0.0
        %1416 = vmatpush1.msra.mxu0 %v295
        %1417 = vmatprep.subr.mxu0 0.0
        %1418 = vmatpush1.msra.mxu0 %v296
        %1419 = vmatprep.subr.mxu0 0.0
        %1420 = vmatpush1.msra.mxu0 %v297
        %1421 = vmatprep.subr.mxu0 0.0
        %1422 = vmatpush1.msra.mxu0 %v298
        %1423 = vmatprep.subr.mxu0 0.0
        %1424 = vmatpush1.msra.mxu0 %v299
        %1425 = vmatprep.subr.mxu0 0.0
        %1426 = vmatpush1.msra.mxu0 %v300
        %1427 = vmatprep.subr.mxu0 0.0
        %1428 = vmatpush1.msra.mxu0 %v301
        %1429 = vmatprep.subr.mxu0 0.0
        %1430 = vmatpush1.msra.mxu0 %v302
        %1431 = vmatprep.subr.mxu0 0.0
        %1432 = vmatpush1.msra.mxu0 %v303
        %1433 = vmatprep.subr.mxu0 0.0
        %1434 = vmatpush1.msra.mxu0 %v304
        %1435 = vmatprep.subr.mxu0 0.0
        %1436 = vmatpush1.msra.mxu0 %v305
        %1437 = vmatprep.subr.mxu0 0.0
        %1438 = vmatpush1.msra.mxu0 %v306
        %1439 = vmatprep.subr.mxu0 0.0
        %1440 = vmatpush1.msra.mxu0 %v307
        %1441 = vmatprep.subr.mxu0 0.0
        %1442 = vmatpush1.msra.mxu0 %v308
        %1443 = vmatprep.subr.mxu0 0.0
        %1444 = vmatpush1.msra.mxu0 %v309
        %1445 = vmatprep.subr.mxu0 0.0
        %1446 = vmatpush1.msra.mxu0 0.0
        %1447 = vmatprep.subr.mxu0 0.0
        %1448 = vmatpush1.msra.mxu0 0.0
        %1449 = vmatprep.subr.mxu0 0.0
        %1450 = vmatpush1.msra.mxu0 0.0
        %1451 = vmatprep.subr.mxu0 0.0
        %1452 = vmatpush1.msra.mxu0 0.0
        %1453 = vmatprep.subr.mxu0 0.0
        %1454 = vmatpush1.msra.mxu0 0.0
        %1455 = vmatprep.subr.mxu0 0.0
        %1456 = vmatpush1.msra.mxu0 0.0
        %1457 = vmatprep.subr.mxu0 0.0
        %1458 = vmatpush1.msra.mxu0 0.0
        %1459 = vmatprep.subr.mxu0 0.0
        %1460 = vmatpush1.msra.mxu0 0.0
        %1461 = vmatprep.subr.mxu0 0.0
        %1462 = vmatpush1.msra.mxu0 0.0
        %1463 = vmatprep.subr.mxu0 0.0
        %1464 = vmatpush1.msra.mxu0 0.0
        %1465 = vmatprep.subr.mxu0 0.0
        %1466 = vmatpush1.msra.mxu0 0.0
        %1467 = vmatprep.subr.mxu0 0.0
        %1468 = vmatpush1.msra.mxu0 0.0
        %1469 = vmatprep.subr.mxu0 0.0
        %1470 = vmatpush1.msra.mxu0 0.0
        %1471 = vmatprep.subr.mxu0 0.0
        %1472 = vmatpush1.msra.mxu0 0.0
        %1473 = vmatprep.subr.mxu0 0.0
        %1474 = vmatpush1.msra.mxu0 0.0
        %1475 = vmatprep.subr.mxu0 0.0
        %1476 = vmatpush1.msra.mxu0 0.0
        %1477 = vmatprep.mubr.f32.mxu0 0.0
        %1478 = vmatmul.mubr.f32.gmra.mrb[0].mxu0 %v1411
        %v1479 = vpop.f32.mrb[0].mxu0
        %v1480 = vadd.f32 0.0, %v1479
        %v1481 = vpop.f32.mrb[0].mxu0
        %1482 = vdwg.mxu0
        %v1483 = vtanh.pop %v1480
        %1484 = vmax.xlane.f32.xlu0 %v1483
        %v1485 = vpop.xlane.xlu0 %1484
        %v1486 = vsub.f32 %v1483, %v1485
        %v1487 = vmul.f32 %v1486, 1.442695
        %v1488 = vpow.pop %v1487
        %1489 = vadd.xlane.f32.xlu0 %v1488
        %v1490 = vpop.xlane.xlu0 %1489
        %v1491 = vmul.f32 %v1490, 0.03125
        %v1492 = vrcp.pop %v1491
        %v1493 = vmul.f32 %v1488, %v1492
        %v1495 = vcombine.high %v1493, %v1493
        %v1497 = vunpack.c.l.s4 1966171168
        %v1498 = vunpack.c.0.s8 %v1497
        %v1499 = vlaneseq
        %v1500 = vshrl.u32 %v1499, 7
        %v1501 = vsub.s32 %v1498, %v1500
        %v1502 = vrot.slane %v1493, %v1501
        %v1504 = vunpack.c.l.s4 1966171168
        %v1505 = vunpack.c.0.s8 %v1504
        %v1506 = vlaneseq
        %v1507 = vshrl.u32 %v1506, 7
        %v1508 = vsub.s32 %v1505, %v1507
        %v1509 = vrot.slane %v1495, %v1508
        %v1510 = vcombine.high %v1502, %v1502
        %v1511 = vcombine.high %v1509, %v1509
        %v1513 = vunpack.c.l.s4 1966171168
        %v1514 = vunpack.c.0.s8 %v1513
        %v1515 = vlaneseq
        %v1516 = vshrl.u32 %v1515, 7
        %v1517 = vsub.s32 %v1514, %v1516
        %v1518 = vrot.slane %v1502, %v1517
        %v1520 = vunpack.c.l.s4 1966171168
        %v1521 = vunpack.c.0.s8 %v1520
        %v1522 = vlaneseq
        %v1523 = vshrl.u32 %v1522, 7
        %v1524 = vsub.s32 %v1521, %v1523
        %v1525 = vrot.slane %v1509, %v1524
        %v1527 = vunpack.c.l.s4 1966171168
        %v1528 = vunpack.c.0.s8 %v1527
        %v1529 = vlaneseq
        %v1530 = vshrl.u32 %v1529, 7
        %v1531 = vsub.s32 %v1528, %v1530
        %v1532 = vrot.slane %v1510, %v1531
        %v1534 = vunpack.c.l.s4 1966171168
        %v1535 = vunpack.c.0.s8 %v1534
        %v1536 = vlaneseq
        %v1537 = vshrl.u32 %v1536, 7
        %v1538 = vsub.s32 %v1535, %v1537
        %v1539 = vrot.slane %v1511, %v1538
        %v1540 = vcombine.high %v1518, %v1518
        %v1541 = vcombine.high %v1525, %v1525
        %v1542 = vcombine.high %v1532, %v1532
        %v1543 = vcombine.high %v1539, %v1539
        %v1544 = vlaneseq
        %v1545 = vshrl.u32 %v1544, 7
        %v1546 = vsub.s32 0, %v1545
        %v1547 = vrot.slane %v1518, %v1546
        %v1548 = vlaneseq
        %v1549 = vshrl.u32 %v1548, 7
        %v1550 = vsub.s32 0, %v1549
        %v1551 = vrot.slane %v1532, %v1550
        %v1552 = vlaneseq
        %v1553 = vshrl.u32 %v1552, 7
        %v1554 = vsub.s32 0, %v1553
        %v1555 = vrot.slane %v1540, %v1554
        %v1556 = vlaneseq
        %v1557 = vshrl.u32 %v1556, 7
        %v1558 = vsub.s32 0, %v1557
        %v1559 = vrot.slane %v1542, %v1558
        %v1560 = vlaneseq
        %v1561 = vshrl.u32 %v1560, 7
        %v1562 = vsub.s32 0, %v1561
        %v1563 = vrot.slane %v1525, %v1562
        %v1564 = vlaneseq
        %v1565 = vshrl.u32 %v1564, 7
        %v1566 = vsub.s32 0, %v1565
        %v1567 = vrot.slane %v1539, %v1566
        %v1568 = vlaneseq
        %v1569 = vshrl.u32 %v1568, 7
        %v1570 = vsub.s32 0, %v1569
        %v1571 = vrot.slane %v1541, %v1570
        %v1572 = vlaneseq
        %v1573 = vshrl.u32 %v1572, 7
        %v1574 = vsub.s32 0, %v1573
        %v1575 = vrot.slane %v1543, %v1574
        %v1584 = vmul.f32 %v888, %v1547
        %v1585 = vmul.f32 %v889, %v1551
        %v1586 = vmul.f32 %v890, %v1555
        %v1587 = vmul.f32 %v891, %v1559
        %v1588 = vmul.f32 %v892, %v1563
        %v1589 = vmul.f32 %v893, %v1567
        %v1590 = vmul.f32 %v894, %v1571
        %v1591 = vmul.f32 %v895, %v1575
        %1592 = vmatprep.subr.mxu0 0.0
        %1593 = vmatpush1.msra.mxu0 %v311
        %1594 = vmatprep.subr.mxu0 0.0
        %1595 = vmatpush1.msra.mxu0 %v312
        %1596 = vmatprep.subr.mxu0 0.0
        %1597 = vmatpush1.msra.mxu0 %v313
        %1598 = vmatprep.subr.mxu0 0.0
        %1599 = vmatpush1.msra.mxu0 %v314
        %1600 = vmatprep.subr.mxu0 0.0
        %1601 = vmatpush1.msra.mxu0 %v315
        %1602 = vmatprep.subr.mxu0 0.0
        %1603 = vmatpush1.msra.mxu0 %v316
        %1604 = vmatprep.subr.mxu0 0.0
        %1605 = vmatpush1.msra.mxu0 %v317
        %1606 = vmatprep.subr.mxu0 0.0
        %1607 = vmatpush1.msra.mxu0 %v318
        %1608 = vmatprep.subr.mxu0 0.0
        %1609 = vmatpush1.msra.mxu0 %v319
        %1610 = vmatprep.subr.mxu0 0.0
        %1611 = vmatpush1.msra.mxu0 %v320
        %1612 = vmatprep.subr.mxu0 0.0
        %1613 = vmatpush1.msra.mxu0 %v321
        %1614 = vmatprep.subr.mxu0 0.0
        %1615 = vmatpush1.msra.mxu0 %v322
        %1616 = vmatprep.subr.mxu0 0.0
        %1617 = vmatpush1.msra.mxu0 %v323
        %1618 = vmatprep.subr.mxu0 0.0
        %1619 = vmatpush1.msra.mxu0 %v324
        %1620 = vmatprep.subr.mxu0 0.0
        %1621 = vmatpush1.msra.mxu0 %v325
        %1622 = vmatprep.subr.mxu0 0.0
        %1623 = vmatpush1.msra.mxu0 %v326
        %1624 = vmatprep.subr.mxu0 0.0
        %1625 = vmatpush1.msra.mxu0 0.0
        %1626 = vmatprep.subr.mxu0 0.0
        %1627 = vmatpush1.msra.mxu0 0.0
        %1628 = vmatprep.subr.mxu0 0.0
        %1629 = vmatpush1.msra.mxu0 0.0
        %1630 = vmatprep.subr.mxu0 0.0
        %1631 = vmatpush1.msra.mxu0 0.0
        %1632 = vmatprep.subr.mxu0 0.0
        %1633 = vmatpush1.msra.mxu0 0.0
        %1634 = vmatprep.subr.mxu0 0.0
        %1635 = vmatpush1.msra.mxu0 0.0
        %1636 = vmatprep.subr.mxu0 0.0
        %1637 = vmatpush1.msra.mxu0 0.0
        %1638 = vmatprep.subr.mxu0 0.0
        %1639 = vmatpush1.msra.mxu0 0.0
        %1640 = vmatprep.subr.mxu0 0.0
        %1641 = vmatpush1.msra.mxu0 0.0
        %1642 = vmatprep.subr.mxu0 0.0
        %1643 = vmatpush1.msra.mxu0 0.0
        %1644 = vmatprep.subr.mxu0 0.0
        %1645 = vmatpush1.msra.mxu0 0.0
        %1646 = vmatprep.subr.mxu0 0.0
        %1647 = vmatpush1.msra.mxu0 0.0
        %1648 = vmatprep.subr.mxu0 0.0
        %1649 = vmatpush1.msra.mxu0 0.0
        %1650 = vmatprep.subr.mxu0 0.0
        %1651 = vmatpush1.msra.mxu0 0.0
        %1652 = vmatprep.subr.mxu0 0.0
        %1653 = vmatpush1.msra.mxu0 0.0
        %1654 = vmatprep.subr.mxu0 0.0
        %1655 = vmatpush1.msra.mxu0 0.0
        %1656 = vmatprep.mubr.f32.mxu0 0.0
        %1657 = vmatmul.mubr.f32.gmra.mrb[0].mxu0 %v1584
        %v1658 = vpop.f32.mrb[0].mxu0
        %v1659 = vadd.f32 0.0, %v1658
        %v1660 = vpop.f32.mrb[0].mxu0
        %1661 = vmatprep.mubr.f32.mxu0 0.0
        %1662 = vmatmul.mubr.f32.gmra.mrb[0].mxu0 %v1585
        %v1663 = vpop.f32.mrb[0].mxu0
        %v1664 = vadd.f32 0.0, %v1663
        %v1665 = vpop.f32.mrb[0].mxu0
        %1666 = vmatprep.mubr.f32.mxu0 0.0
        %1667 = vmatmul.mubr.f32.gmra.mrb[0].mxu0 %v1586
        %v1668 = vpop.f32.mrb[0].mxu0
        %v1669 = vadd.f32 0.0, %v1668
        %v1670 = vpop.f32.mrb[0].mxu0
        %1671 = vmatprep.mubr.f32.mxu0 0.0
        %1672 = vmatmul.mubr.f32.gmra.mrb[0].mxu0 %v1587
        %v1673 = vpop.f32.mrb[0].mxu0
        %v1674 = vadd.f32 0.0, %v1673
        %v1675 = vpop.f32.mrb[0].mxu0
        %1676 = vmatprep.mubr.f32.mxu0 0.0
        %1677 = vmatmul.mubr.f32.gmra.mrb[0].mxu0 %v1588
        %v1678 = vpop.f32.mrb[0].mxu0
        %v1679 = vadd.f32 0.0, %v1678
        %v1680 = vpop.f32.mrb[0].mxu0
        %1681 = vmatprep.mubr.f32.mxu0 0.0
        %1682 = vmatmul.mubr.f32.gmra.mrb[0].mxu0 %v1589
        %v1683 = vpop.f32.mrb[0].mxu0
        %v1684 = vadd.f32 0.0, %v1683
        %v1685 = vpop.f32.mrb[0].mxu0
        %1686 = vmatprep.mubr.f32.mxu0 0.0
        %1687 = vmatmul.mubr.f32.gmra.mrb[0].mxu0 %v1590
        %v1688 = vpop.f32.mrb[0].mxu0
        %v1689 = vadd.f32 0.0, %v1688
        %v1690 = vpop.f32.mrb[0].mxu0
        %1691 = vmatprep.mubr.f32.mxu0 0.0
        %1692 = vmatmul.mubr.f32.gmra.mrb[0].mxu0 %v1591
        %v1693 = vpop.f32.mrb[0].mxu0
        %v1694 = vadd.f32 0.0, %v1693
        %v1695 = vpop.f32.mrb[0].mxu0
        %1696 = vdwg.mxu0
        %v1697 = vlaneseq
        %v1698 = vshrl.u32 %v1697, 7
        %v1699 = vsub.s32 0, %v1698
        %v1700 = vrot.slane %v368, %v1699
        %v1701 = vmul.f32 %v1659, %v1700
        %v1702 = vmul.f32 %v1664, %v1700
        %v1703 = vmul.f32 %v1669, %v1700
        %v1704 = vmul.f32 %v1674, %v1700
        %v1705 = vmul.f32 %v1679, %v1700
        %v1706 = vmul.f32 %v1684, %v1700
        %v1707 = vmul.f32 %v1689, %v1700
        %v1708 = vmul.f32 %v1694, %v1700
        %1709 = vadd.xlane.f32.xlu0 %v1701
        %v1710 = vpop.xlane.xlu0 %1709
        %1711 = vadd.xlane.f32.xlu0 %v1702
        %v1712 = vpop.xlane.xlu0 %1711
        %1713 = vadd.xlane.f32.xlu0 %v1703
        %v1714 = vpop.xlane.xlu0 %1713
        %1715 = vadd.xlane.f32.xlu0 %v1704
        %v1716 = vpop.xlane.xlu0 %1715
        %1717 = vadd.xlane.f32.xlu0 %v1705
        %v1718 = vpop.xlane.xlu0 %1717
        %1719 = vadd.xlane.f32.xlu0 %v1706
        %v1720 = vpop.xlane.xlu0 %1719
        %1721 = vadd.xlane.f32.xlu0 %v1707
        %v1722 = vpop.xlane.xlu0 %1721
        %1723 = vadd.xlane.f32.xlu0 %v1708
        %v1724 = vpop.xlane.xlu0 %1723
        %v1725 = vtanh.pop %v1710
        %v1726 = vtanh.pop %v1712
        %v1727 = vtanh.pop %v1714
        %v1728 = vtanh.pop %v1716
        %v1729 = vtanh.pop %v1718
        %v1730 = vtanh.pop %v1720
        %v1731 = vtanh.pop %v1722
        %v1732 = vtanh.pop %v1724
        %v1733 = vrot.slane %v1725, 4
        %v1734 = vmax.f32 %v1725, %v1733
        %v1735 = vrot.slane %v1734, 2
        %v1736 = vmax.f32 %v1734, %v1735
        %v1737 = vrot.slane %v1736, 1
        %v1738 = vmax.f32 %v1736, %v1737
        %v1739 = vrot.slane %v1726, 4
        %v1740 = vmax.f32 %v1726, %v1739
        %v1741 = vrot.slane %v1740, 2
        %v1742 = vmax.f32 %v1740, %v1741
        %v1743 = vrot.slane %v1742, 1
        %v1744 = vmax.f32 %v1742, %v1743
        %v1745 = vrot.slane %v1727, 4
        %v1746 = vmax.f32 %v1727, %v1745
        %v1747 = vrot.slane %v1746, 2
        %v1748 = vmax.f32 %v1746, %v1747
        %v1749 = vrot.slane %v1748, 1
        %v1750 = vmax.f32 %v1748, %v1749
        %v1751 = vrot.slane %v1728, 4
        %v1752 = vmax.f32 %v1728, %v1751
        %v1753 = vrot.slane %v1752, 2
        %v1754 = vmax.f32 %v1752, %v1753
        %v1755 = vrot.slane %v1754, 1
        %v1756 = vmax.f32 %v1754, %v1755
        %v1757 = vrot.slane %v1729, 4
        %v1758 = vmax.f32 %v1729, %v1757
        %v1759 = vrot.slane %v1758, 2
        %v1760 = vmax.f32 %v1758, %v1759
        %v1761 = vrot.slane %v1760, 1
        %v1762 = vmax.f32 %v1760, %v1761
        %v1763 = vrot.slane %v1730, 4
        %v1764 = vmax.f32 %v1730, %v1763
        %v1765 = vrot.slane %v1764, 2
        %v1766 = vmax.f32 %v1764, %v1765
        %v1767 = vrot.slane %v1766, 1
        %v1768 = vmax.f32 %v1766, %v1767
        %v1769 = vrot.slane %v1731, 4
        %v1770 = vmax.f32 %v1731, %v1769
        %v1771 = vrot.slane %v1770, 2
        %v1772 = vmax.f32 %v1770, %v1771
        %v1773 = vrot.slane %v1772, 1
        %v1774 = vmax.f32 %v1772, %v1773
        %v1775 = vrot.slane %v1732, 4
        %v1776 = vmax.f32 %v1732, %v1775
        %v1777 = vrot.slane %v1776, 2
        %v1778 = vmax.f32 %v1776, %v1777
        %v1779 = vrot.slane %v1778, 1
        %v1780 = vmax.f32 %v1778, %v1779
        %v1781 = vsub.f32 %v1725, %v1738
        %v1782 = vsub.f32 %v1726, %v1744
        %v1783 = vsub.f32 %v1727, %v1750
        %v1784 = vsub.f32 %v1728, %v1756
        %v1785 = vsub.f32 %v1729, %v1762
        %v1786 = vsub.f32 %v1730, %v1768
        %v1787 = vsub.f32 %v1731, %v1774
        %v1788 = vsub.f32 %v1732, %v1780
        %v1789 = vmul.f32 %v1781, 1.442695
        %v1790 = vpow.pop %v1789
        %v1791 = vmul.f32 %v1782, 1.442695
        %v1792 = vpow.pop %v1791
        %v1793 = vmul.f32 %v1783, 1.442695
        %v1794 = vpow.pop %v1793
        %v1795 = vmul.f32 %v1784, 1.442695
        %v1796 = vpow.pop %v1795
        %v1797 = vmul.f32 %v1785, 1.442695
        %v1798 = vpow.pop %v1797
        %v1799 = vmul.f32 %v1786, 1.442695
        %v1800 = vpow.pop %v1799
        %v1801 = vmul.f32 %v1787, 1.442695
        %v1802 = vpow.pop %v1801
        %v1803 = vmul.f32 %v1788, 1.442695
        %v1804 = vpow.pop %v1803
        %v1805 = vrot.slane %v1790, 4
        %v1806 = vadd.f32 %v1790, %v1805
        %v1807 = vrot.slane %v1806, 2
        %v1808 = vadd.f32 %v1806, %v1807
        %v1809 = vrot.slane %v1808, 1
        %v1810 = vadd.f32 %v1808, %v1809
        %v1811 = vrot.slane %v1792, 4
        %v1812 = vadd.f32 %v1792, %v1811
        %v1813 = vrot.slane %v1812, 2
        %v1814 = vadd.f32 %v1812, %v1813
        %v1815 = vrot.slane %v1814, 1
        %v1816 = vadd.f32 %v1814, %v1815
        %v1817 = vrot.slane %v1794, 4
        %v1818 = vadd.f32 %v1794, %v1817
        %v1819 = vrot.slane %v1818, 2
        %v1820 = vadd.f32 %v1818, %v1819
        %v1821 = vrot.slane %v1820, 1
        %v1822 = vadd.f32 %v1820, %v1821
        %v1823 = vrot.slane %v1796, 4
        %v1824 = vadd.f32 %v1796, %v1823
        %v1825 = vrot.slane %v1824, 2
        %v1826 = vadd.f32 %v1824, %v1825
        %v1827 = vrot.slane %v1826, 1
        %v1828 = vadd.f32 %v1826, %v1827
        %v1829 = vrot.slane %v1798, 4
        %v1830 = vadd.f32 %v1798, %v1829
        %v1831 = vrot.slane %v1830, 2
        %v1832 = vadd.f32 %v1830, %v1831
        %v1833 = vrot.slane %v1832, 1
        %v1834 = vadd.f32 %v1832, %v1833
        %v1835 = vrot.slane %v1800, 4
        %v1836 = vadd.f32 %v1800, %v1835
        %v1837 = vrot.slane %v1836, 2
        %v1838 = vadd.f32 %v1836, %v1837
        %v1839 = vrot.slane %v1838, 1
        %v1840 = vadd.f32 %v1838, %v1839
        %v1841 = vrot.slane %v1802, 4
        %v1842 = vadd.f32 %v1802, %v1841
        %v1843 = vrot.slane %v1842, 2
        %v1844 = vadd.f32 %v1842, %v1843
        %v1845 = vrot.slane %v1844, 1
        %v1846 = vadd.f32 %v1844, %v1845
        %v1847 = vrot.slane %v1804, 4
        %v1848 = vadd.f32 %v1804, %v1847
        %v1849 = vrot.slane %v1848, 2
        %v1850 = vadd.f32 %v1848, %v1849
        %v1851 = vrot.slane %v1850, 1
        %v1852 = vadd.f32 %v1850, %v1851
        %v1853 = vrcp.pop %v1810
        %v1854 = vmul.f32 %v1790, %v1853
        %v1855 = vrcp.pop %v1816
        %v1856 = vmul.f32 %v1792, %v1855
        %v1857 = vrcp.pop %v1822
        %v1858 = vmul.f32 %v1794, %v1857
        %v1859 = vrcp.pop %v1828
        %v1860 = vmul.f32 %v1796, %v1859
        %v1861 = vrcp.pop %v1834
        %v1862 = vmul.f32 %v1798, %v1861
        %v1863 = vrcp.pop %v1840
        %v1864 = vmul.f32 %v1800, %v1863
        %v1865 = vrcp.pop %v1846
        %v1866 = vmul.f32 %v1802, %v1865
        %v1867 = vrcp.pop %v1852
        %v1868 = vmul.f32 %v1804, %v1867
        %v1869 = vmul.f32 %v1659, %v1854
        %v1870 = vmul.f32 %v1664, %v1856
        %v1871 = vmul.f32 %v1669, %v1858
        %v1872 = vmul.f32 %v1674, %v1860
        %v1873 = vmul.f32 %v1679, %v1862
        %v1874 = vmul.f32 %v1684, %v1864
        %v1875 = vmul.f32 %v1689, %v1866
        %v1876 = vmul.f32 %v1694, %v1868
        %v1877 = vrot.slane %v1869, 4
        %v1878 = vadd.f32 %v1869, %v1877
        %v1879 = vrot.slane %v1878, 2
        %v1880 = vadd.f32 %v1878, %v1879
        %v1881 = vrot.slane %v1880, 1
        %v1882 = vadd.f32 %v1880, %v1881
        %v1883 = vrot.slane %v1870, 4
        %v1884 = vadd.f32 %v1870, %v1883
        %v1885 = vrot.slane %v1884, 2
        %v1886 = vadd.f32 %v1884, %v1885
        %v1887 = vrot.slane %v1886, 1
        %v1888 = vadd.f32 %v1886, %v1887
        %v1889 = vrot.slane %v1871, 4
        %v1890 = vadd.f32 %v1871, %v1889
        %v1891 = vrot.slane %v1890, 2
        %v1892 = vadd.f32 %v1890, %v1891
        %v1893 = vrot.slane %v1892, 1
        %v1894 = vadd.f32 %v1892, %v1893
        %v1895 = vrot.slane %v1872, 4
        %v1896 = vadd.f32 %v1872, %v1895
        %v1897 = vrot.slane %v1896, 2
        %v1898 = vadd.f32 %v1896, %v1897
        %v1899 = vrot.slane %v1898, 1
        %v1900 = vadd.f32 %v1898, %v1899
        %v1901 = vrot.slane %v1873, 4
        %v1902 = vadd.f32 %v1873, %v1901
        %v1903 = vrot.slane %v1902, 2
        %v1904 = vadd.f32 %v1902, %v1903
        %v1905 = vrot.slane %v1904, 1
        %v1906 = vadd.f32 %v1904, %v1905
        %v1907 = vrot.slane %v1874, 4
        %v1908 = vadd.f32 %v1874, %v1907
        %v1909 = vrot.slane %v1908, 2
        %v1910 = vadd.f32 %v1908, %v1909
        %v1911 = vrot.slane %v1910, 1
        %v1912 = vadd.f32 %v1910, %v1911
        %v1913 = vrot.slane %v1875, 4
        %v1914 = vadd.f32 %v1875, %v1913
        %v1915 = vrot.slane %v1914, 2
        %v1916 = vadd.f32 %v1914, %v1915
        %v1917 = vrot.slane %v1916, 1
        %v1918 = vadd.f32 %v1916, %v1917
        %v1919 = vrot.slane %v1876, 4
        %v1920 = vadd.f32 %v1876, %v1919
        %v1921 = vrot.slane %v1920, 2
        %v1922 = vadd.f32 %v1920, %v1921
        %v1923 = vrot.slane %v1922, 1
        %v1924 = vadd.f32 %v1922, %v1923
        %v1925 = vmul.f32 %v1882, %v1213
        %v1926 = vmul.f32 %v1888, %v1213
        %v1927 = vmul.f32 %v1894, %v1213
        %v1928 = vmul.f32 %v1900, %v1213
        %v1929 = vmul.f32 %v1906, %v1213
        %v1930 = vmul.f32 %v1912, %v1213
        %v1931 = vmul.f32 %v1918, %v1213
        %v1932 = vmul.f32 %v1924, %v1213
        %v1933 = vsub.f32 %v1869, %v1925
        %v1934 = vsub.f32 %v1870, %v1926
        %v1935 = vsub.f32 %v1871, %v1927
        %v1936 = vsub.f32 %v1872, %v1928
        %v1937 = vsub.f32 %v1873, %v1929
        %v1938 = vsub.f32 %v1874, %v1930
        %v1939 = vsub.f32 %v1875, %v1931
        %v1940 = vsub.f32 %v1876, %v1932
        %v1941 = vmul.f32 %v1933, %v1933
        %v1942 = vmul.f32 %v1934, %v1934
        %v1943 = vmul.f32 %v1935, %v1935
        %v1944 = vmul.f32 %v1936, %v1936
        %v1945 = vmul.f32 %v1937, %v1937
        %v1946 = vmul.f32 %v1938, %v1938
        %v1947 = vmul.f32 %v1939, %v1939
        %v1948 = vmul.f32 %v1940, %v1940
        %v1949 = vrot.slane %v1941, 4
        %v1950 = vadd.f32 %v1941, %v1949
        %v1951 = vrot.slane %v1950, 2
        %v1952 = vadd.f32 %v1950, %v1951
        %v1953 = vrot.slane %v1952, 1
        %v1954 = vadd.f32 %v1952, %v1953
        %v1955 = vrot.slane %v1942, 4
        %v1956 = vadd.f32 %v1942, %v1955
        %v1957 = vrot.slane %v1956, 2
        %v1958 = vadd.f32 %v1956, %v1957
        %v1959 = vrot.slane %v1958, 1
        %v1960 = vadd.f32 %v1958, %v1959
        %v1961 = vrot.slane %v1943, 4
        %v1962 = vadd.f32 %v1943, %v1961
        %v1963 = vrot.slane %v1962, 2
        %v1964 = vadd.f32 %v1962, %v1963
        %v1965 = vrot.slane %v1964, 1
        %v1966 = vadd.f32 %v1964, %v1965
        %v1967 = vrot.slane %v1944, 4
        %v1968 = vadd.f32 %v1944, %v1967
        %v1969 = vrot.slane %v1968, 2
        %v1970 = vadd.f32 %v1968, %v1969
        %v1971 = vrot.slane %v1970, 1
        %v1972 = vadd.f32 %v1970, %v1971
        %v1973 = vrot.slane %v1945, 4
        %v1974 = vadd.f32 %v1945, %v1973
        %v1975 = vrot.slane %v1974, 2
        %v1976 = vadd.f32 %v1974, %v1975
        %v1977 = vrot.slane %v1976, 1
        %v1978 = vadd.f32 %v1976, %v1977
        %v1979 = vrot.slane %v1946, 4
        %v1980 = vadd.f32 %v1946, %v1979
        %v1981 = vrot.slane %v1980, 2
        %v1982 = vadd.f32 %v1980, %v1981
        %v1983 = vrot.slane %v1982, 1
        %v1984 = vadd.f32 %v1982, %v1983
        %v1985 = vrot.slane %v1947, 4
        %v1986 = vadd.f32 %v1947, %v1985
        %v1987 = vrot.slane %v1986, 2
        %v1988 = vadd.f32 %v1986, %v1987
        %v1989 = vrot.slane %v1988, 1
        %v1990 = vadd.f32 %v1988, %v1989
        %v1991 = vrot.slane %v1948, 4
        %v1992 = vadd.f32 %v1948, %v1991
        %v1993 = vrot.slane %v1992, 2
        %v1994 = vadd.f32 %v1992, %v1993
        %v1995 = vrot.slane %v1994, 1
        %v1996 = vadd.f32 %v1994, %v1995
        %v1997 = vmul.f32 %v1954, %v1286
        %v1998 = vmul.f32 %v1960, %v1286
        %v1999 = vmul.f32 %v1966, %v1286
        %v2000 = vmul.f32 %v1972, %v1286
        %v2001 = vmul.f32 %v1978, %v1286
        %v2002 = vmul.f32 %v1984, %v1286
        %v2003 = vmul.f32 %v1990, %v1286
        %v2004 = vmul.f32 %v1996, %v1286
        %v2005 = vrsqrt.pop %v1997
        %v2006 = vmul.f32 %v1997, %v2005
        %vm2007 = vcmp.eq.f32.partialorder %v1997, inf
        %v2008 = vsel %vm2007, %v1997, %v2006
        %vm2009 = vcmp.eq.f32.partialorder %v1997, 0.0
        %v2010 = vand.u32 %v1997, 2147483648
        %v2011 = vsel %vm2009, %v2010, %v2008
        %v2012 = vrsqrt.pop %v1998
        %v2013 = vmul.f32 %v1998, %v2012
        %vm2014 = vcmp.eq.f32.partialorder %v1998, inf
        %v2015 = vsel %vm2014, %v1998, %v2013
        %vm2016 = vcmp.eq.f32.partialorder %v1998, 0.0
        %v2017 = vand.u32 %v1998, 2147483648
        %v2018 = vsel %vm2016, %v2017, %v2015
        %v2019 = vrsqrt.pop %v1999
        %v2020 = vmul.f32 %v1999, %v2019
        %vm2021 = vcmp.eq.f32.partialorder %v1999, inf
        %v2022 = vsel %vm2021, %v1999, %v2020
        %vm2023 = vcmp.eq.f32.partialorder %v1999, 0.0
        %v2024 = vand.u32 %v1999, 2147483648
        %v2025 = vsel %vm2023, %v2024, %v2022
        %v2026 = vrsqrt.pop %v2000
        %v2027 = vmul.f32 %v2000, %v2026
        %vm2028 = vcmp.eq.f32.partialorder %v2000, inf
        %v2029 = vsel %vm2028, %v2000, %v2027
        %vm2030 = vcmp.eq.f32.partialorder %v2000, 0.0
        %v2031 = vand.u32 %v2000, 2147483648
        %v2032 = vsel %vm2030, %v2031, %v2029
        %v2033 = vrsqrt.pop %v2001
        %v2034 = vmul.f32 %v2001, %v2033
        %vm2035 = vcmp.eq.f32.partialorder %v2001, inf
        %v2036 = vsel %vm2035, %v2001, %v2034
        %vm2037 = vcmp.eq.f32.partialorder %v2001, 0.0
        %v2038 = vand.u32 %v2001, 2147483648
        %v2039 = vsel %vm2037, %v2038, %v2036
        %v2040 = vrsqrt.pop %v2002
        %v2041 = vmul.f32 %v2002, %v2040
        %vm2042 = vcmp.eq.f32.partialorder %v2002, inf
        %v2043 = vsel %vm2042, %v2002, %v2041
        %vm2044 = vcmp.eq.f32.partialorder %v2002, 0.0
        %v2045 = vand.u32 %v2002, 2147483648
        %v2046 = vsel %vm2044, %v2045, %v2043
        %v2047 = vrsqrt.pop %v2003
        %v2048 = vmul.f32 %v2003, %v2047
        %vm2049 = vcmp.eq.f32.partialorder %v2003, inf
        %v2050 = vsel %vm2049, %v2003, %v2048
        %vm2051 = vcmp.eq.f32.partialorder %v2003, 0.0
        %v2052 = vand.u32 %v2003, 2147483648
        %v2053 = vsel %vm2051, %v2052, %v2050
        %v2054 = vrsqrt.pop %v2004
        %v2055 = vmul.f32 %v2004, %v2054
        %vm2056 = vcmp.eq.f32.partialorder %v2004, inf
        %v2057 = vsel %vm2056, %v2004, %v2055
        %vm2058 = vcmp.eq.f32.partialorder %v2004, 0.0
        %v2059 = vand.u32 %v2004, 2147483648
        %v2060 = vsel %vm2058, %v2059, %v2057
        %v2069 = vsel %vm1392, %v2018, %v2011
        %v2070 = vsel %vm1395, %v2025, %v2069
        %v2071 = vsel %vm1398, %v2032, %v2070
        %v2072 = vsel %vm1401, %v2039, %v2071
        %v2073 = vsel %vm1404, %v2046, %v2072
        %v2074 = vsel %vm1407, %v2053, %v2073
        %v2075 = vsel %vm1410, %v2060, %v2074
        %2077 = vmatprep.subr.mxu0 0.0
        %2078 = vmatpush1.msra.mxu0 %v345
        %2079 = vmatprep.subr.mxu0 0.0
        %2080 = vmatpush1.msra.mxu0 %v346
        %2081 = vmatprep.subr.mxu0 0.0
        %2082 = vmatpush1.msra.mxu0 %v347
        %2083 = vmatprep.subr.mxu0 0.0
        %2084 = vmatpush1.msra.mxu0 %v348
        %2085 = vmatprep.subr.mxu0 0.0
        %2086 = vmatpush1.msra.mxu0 %v349
        %2087 = vmatprep.subr.mxu0 0.0
        %2088 = vmatpush1.msra.mxu0 %v350
        %2089 = vmatprep.subr.mxu0 0.0
        %2090 = vmatpush1.msra.mxu0 %v351
        %2091 = vmatprep.subr.mxu0 0.0
        %2092 = vmatpush1.msra.mxu0 %v352
        %2093 = vmatprep.subr.mxu0 0.0
        %2094 = vmatpush1.msra.mxu0 %v353
        %2095 = vmatprep.subr.mxu0 0.0
        %2096 = vmatpush1.msra.mxu0 %v354
        %2097 = vmatprep.subr.mxu0 0.0
        %2098 = vmatpush1.msra.mxu0 %v355
        %2099 = vmatprep.subr.mxu0 0.0
        %2100 = vmatpush1.msra.mxu0 %v356
        %2101 = vmatprep.subr.mxu0 0.0
        %2102 = vmatpush1.msra.mxu0 %v357
        %2103 = vmatprep.subr.mxu0 0.0
        %2104 = vmatpush1.msra.mxu0 %v358
        %2105 = vmatprep.subr.mxu0 0.0
        %2106 = vmatpush1.msra.mxu0 %v359
        %2107 = vmatprep.subr.mxu0 0.0
        %2108 = vmatpush1.msra.mxu0 %v360
        %2109 = vmatprep.subr.mxu0 0.0
        %2110 = vmatpush1.msra.mxu0 0.0
        %2111 = vmatprep.subr.mxu0 0.0
        %2112 = vmatpush1.msra.mxu0 0.0
        %2113 = vmatprep.subr.mxu0 0.0
        %2114 = vmatpush1.msra.mxu0 0.0
        %2115 = vmatprep.subr.mxu0 0.0
        %2116 = vmatpush1.msra.mxu0 0.0
        %2117 = vmatprep.subr.mxu0 0.0
        %2118 = vmatpush1.msra.mxu0 0.0
        %2119 = vmatprep.subr.mxu0 0.0
        %2120 = vmatpush1.msra.mxu0 0.0
        %2121 = vmatprep.subr.mxu0 0.0
        %2122 = vmatpush1.msra.mxu0 0.0
        %2123 = vmatprep.subr.mxu0 0.0
        %2124 = vmatpush1.msra.mxu0 0.0
        %2125 = vmatprep.subr.mxu0 0.0
        %2126 = vmatpush1.msra.mxu0 0.0
        %2127 = vmatprep.subr.mxu0 0.0
        %2128 = vmatpush1.msra.mxu0 0.0
        %2129 = vmatprep.subr.mxu0 0.0
        %2130 = vmatpush1.msra.mxu0 0.0
        %2131 = vmatprep.subr.mxu0 0.0
        %2132 = vmatpush1.msra.mxu0 0.0
        %2133 = vmatprep.subr.mxu0 0.0
        %2134 = vmatpush1.msra.mxu0 0.0
        %2135 = vmatprep.subr.mxu0 0.0
        %2136 = vmatpush1.msra.mxu0 0.0
        %2137 = vmatprep.subr.mxu0 0.0
        %2138 = vmatpush1.msra.mxu0 0.0
        %2139 = vmatprep.subr.mxu0 0.0
        %2140 = vmatpush1.msra.mxu0 0.0
        %2141 = vmatprep.mubr.f32.mxu0 0.0
        %2142 = vmatmul.mubr.f32.gmra.mrb[0].mxu0 %v2075
        %v2143 = vpop.f32.mrb[0].mxu0
        %v2144 = vadd.f32 0.0, %v2143
        %v2145 = vpop.f32.mrb[0].mxu0
        %2146 = vdwg.mxu0
        %v2155 = vsel %vm1392, %v1888, %v1882
        %v2156 = vsel %vm1395, %v1894, %v2155
        %v2157 = vsel %vm1398, %v1900, %v2156
        %v2158 = vsel %vm1401, %v1906, %v2157
        %v2159 = vsel %vm1404, %v1912, %v2158
        %v2160 = vsel %vm1407, %v1918, %v2159
        %v2161 = vsel %vm1410, %v1924, %v2160
        %2163 = vmatprep.subr.mxu0 0.0
        %2164 = vmatpush1.msra.mxu0 %v328
        %2165 = vmatprep.subr.mxu0 0.0
        %2166 = vmatpush1.msra.mxu0 %v329
        %2167 = vmatprep.subr.mxu0 0.0
        %2168 = vmatpush1.msra.mxu0 %v330
        %2169 = vmatprep.subr.mxu0 0.0
        %2170 = vmatpush1.msra.mxu0 %v331
        %2171 = vmatprep.subr.mxu0 0.0
        %2172 = vmatpush1.msra.mxu0 %v332
        %2173 = vmatprep.subr.mxu0 0.0
        %2174 = vmatpush1.msra.mxu0 %v333
        %2175 = vmatprep.subr.mxu0 0.0
        %2176 = vmatpush1.msra.mxu0 %v334
        %2177 = vmatprep.subr.mxu0 0.0
        %2178 = vmatpush1.msra.mxu0 %v335
        %2179 = vmatprep.subr.mxu0 0.0
        %2180 = vmatpush1.msra.mxu0 %v336
        %2181 = vmatprep.subr.mxu0 0.0
        %2182 = vmatpush1.msra.mxu0 %v337
        %2183 = vmatprep.subr.mxu0 0.0
        %2184 = vmatpush1.msra.mxu0 %v338
        %2185 = vmatprep.subr.mxu0 0.0
        %2186 = vmatpush1.msra.mxu0 %v339
        %2187 = vmatprep.subr.mxu0 0.0
        %2188 = vmatpush1.msra.mxu0 %v340
        %2189 = vmatprep.subr.mxu0 0.0
        %2190 = vmatpush1.msra.mxu0 %v341
        %2191 = vmatprep.subr.mxu0 0.0
        %2192 = vmatpush1.msra.mxu0 %v342
        %2193 = vmatprep.subr.mxu0 0.0
        %2194 = vmatpush1.msra.mxu0 %v343
        %2195 = vmatprep.subr.mxu0 0.0
        %2196 = vmatpush1.msra.mxu0 0.0
        %2197 = vmatprep.subr.mxu0 0.0
        %2198 = vmatpush1.msra.mxu0 0.0
        %2199 = vmatprep.subr.mxu0 0.0
        %2200 = vmatpush1.msra.mxu0 0.0
        %2201 = vmatprep.subr.mxu0 0.0
        %2202 = vmatpush1.msra.mxu0 0.0
        %2203 = vmatprep.subr.mxu0 0.0
        %2204 = vmatpush1.msra.mxu0 0.0
        %2205 = vmatprep.subr.mxu0 0.0
        %2206 = vmatpush1.msra.mxu0 0.0
        %2207 = vmatprep.subr.mxu0 0.0
        %2208 = vmatpush1.msra.mxu0 0.0
        %2209 = vmatprep.subr.mxu0 0.0
        %2210 = vmatpush1.msra.mxu0 0.0
        %2211 = vmatprep.subr.mxu0 0.0
        %2212 = vmatpush1.msra.mxu0 0.0
        %2213 = vmatprep.subr.mxu0 0.0
        %2214 = vmatpush1.msra.mxu0 0.0
        %2215 = vmatprep.subr.mxu0 0.0
        %2216 = vmatpush1.msra.mxu0 0.0
        %2217 = vmatprep.subr.mxu0 0.0
        %2218 = vmatpush1.msra.mxu0 0.0
        %2219 = vmatprep.subr.mxu0 0.0
        %2220 = vmatpush1.msra.mxu0 0.0
        %2221 = vmatprep.subr.mxu0 0.0
        %2222 = vmatpush1.msra.mxu0 0.0
        %2223 = vmatprep.subr.mxu0 0.0
        %2224 = vmatpush1.msra.mxu0 0.0
        %2225 = vmatprep.subr.mxu0 0.0
        %2226 = vmatpush1.msra.mxu0 0.0
        %2227 = vmatprep.mubr.f32.mxu0 0.0
        %2228 = vmatmul.mubr.f32.gmra.mrb[0].mxu0 %v2161
        %v2229 = vpop.f32.mrb[0].mxu0
        %v2230 = vadd.f32 %v2144, %v2229
        %v2231 = vpop.f32.mrb[0].mxu0
        %2232 = vdwg.mxu0
        %v2233 = vlaneseq
        %v2234 = vshrl.u32 %v2233, 7
        %v2235 = vsub.s32 0, %v2234
        %v2236 = vrot.slane %v369, %v2235
        %v2237 = vadd.f32 %v2230, %v2236
        %2238 = vadd.xlane.f32.xlu0 %v2237
        %v2239 = vpop.xlane.xlu0 %2238
        %v2240 = vrcp.pop 128.0
        %v2241 = vmul.f32 %v2239, %v2240
        %v2242 = vsub.f32 %v2237, %v2241
        %v2243 = vmul.f32 %v2242, %v2242
        %2244 = vadd.xlane.f32.xlu0 %v2243
        %v2245 = vpop.xlane.xlu0 %2244
        %v2246 = vmul.f32 %v2245, %v2240
        %v2247 = vadd.f32 %v2246, 1e-12
        %v2248 = vrsqrt.pop %v2247
        %v2249 = vmul.f32 %v2242, %v2248
        %v2250 = vlaneseq
        %v2251 = vshrl.u32 %v2250, 7
        %v2252 = vsub.s32 0, %v2251
        %v2253 = vrot.slane %v370, %v2252
        %v2254 = vmul.f32 %v2249, %v2253
        %v2255 = vlaneseq
        %v2256 = vshrl.u32 %v2255, 7
        %v2257 = vsub.s32 0, %v2256
        %v2258 = vrot.slane %v371, %v2257
        %v2259 = vadd.f32 %v2254, %v2258
        %2260 = vst [vmem:[%s259] sm:$0xff] %v2259
        %s2261 = sand.u32 %s120, 1
        %s2262 = scalar_lea.sflag [#allocation4], %s2261
        %s2263 = sand.u32 %s120, 1
        %s2264 = smul.addr %s2263, 8
        %s2265 = scalar_lea.vmem [#allocation10], %s2264
        // Predicated region
        $region53: #{tpu_custom_call.1} parent=35 // pred_check
          %p2266 = pneg %p130
        $region54: #{tpu_custom_call.1} parent=35 // pred_check_branch
          %2268 = sbr.rel (%p2266) target = $region56
        $region55: #{tpu_custom_call.1} parent=35 // pred_region
          %s2270 = ssub.s32 128, 128
          %2271 = vsyncadd %s2262, %s2270
          %s2272 = smul.addr %s23, 128
          %s2273 = scalar_lea.hbm %s4, %s2272
          %s2275 = sshll.u32 %s2265, 4
          %s2276 = int_to_ptr.vmem [resolvable:$true] %s2275
          %2278 = dma.vmem_to_hbm [thread:$0]  %s2276, 128, %s2273, %s2262
        $region56: #{tpu_custom_call.1} parent=35 // pred_fallthru
          _
      $region36: #{tpu_custom_call.1} parent=5 // pred_fallthru
        _
      %p2279 = scmp.le.s32.totalorder 2, %s18
      // Predicated region
      $region57: #{tpu_custom_call.1} parent=5 // pred_check
        %p2280 = pneg %p2279
      $region58: #{tpu_custom_call.1} parent=5 // pred_check_branch
        %2282 = sbr.rel (%p2280) target = $region60
      $region59: #{tpu_custom_call.1} parent=5 // pred_region
        %s2283 = ssub.s32 %s18, 2
        // Predicated region
        $region61: #{tpu_custom_call.1} parent=59 // pred_check
          %p2284 = pneg %p136
        $region62: #{tpu_custom_call.1} parent=59 // pred_check_branch
          %2286 = sbr.rel (%p2284) target = $region64
        $region63: #{tpu_custom_call.1} parent=59 // pred_region
          %s2287 = sand.u32 %s121, 1
          %s2288 = scalar_lea.sflag [#allocation4], %s2287
          %s2289 = sand.u32 %s121, 1
          %s2290 = smul.addr %s2289, 8
          %s2291 = scalar_lea.vmem [#allocation10], %s2290
          %2292 = dma.done %s2288, 128
        $region64: #{tpu_custom_call.1} parent=59 // pred_fallthru
          _
      $region60: #{tpu_custom_call.1} parent=5 // pred_fallthru
        _
    $region6: #{tpu_custom_call.1} parent=1 // loop_footer
      %s22 = sadd.s32 1, %s18
    $region7: #{tpu_custom_call.1} parent=1 // loop_footer_branch
      %17 = sbr.rel target = $region3
    $region8: #{tpu_custom_call.1} parent=1 // loop_exit
      _
    %2293 = vsyncpa [#allocation3], 1
    %s2294 = scalar_lea.sflag [#allocation3], 1
    %2295 = vsyncpa %s2294, 1
    %2296 = vsyncpa [#allocation6], 1
    %2297 = vsyncpa [#allocation9], 1
    %2298 = vsyncpa [#allocation4], 1
    %s2299 = scalar_lea.sflag [#allocation4], 1
    %2300 = vsyncpa %s2299, 1

</llo_original>
